<compile_context>
chip_gen: v6e
topology: v6e:2x2x1
jax: 0.10.0
libtpu: 0.0.40
codegen_flags: <defaults>
</compile_context>

<pallas_src>
import functools
import math

import numpy as np
import jax
import jax.numpy as jnp
from jax.experimental import pallas as pl
from jax.experimental.pallas import tpu as pltpu


# ----------------------------------------------------------------------------
# Static log-sparse mask (data independent; cached, dense prefix vectorized).
# ----------------------------------------------------------------------------
@functools.lru_cache(maxsize=8)
def _log_mask_np(win_len, sub_len):
    log_l = int(math.ceil(math.log2(sub_len)))
    mask = np.zeros((win_len, win_len), dtype=np.bool_)
    thresh = (win_len // sub_len) * 2 * log_l
    n_dense = min(win_len, max(thresh, 0))
    if n_dense > 0:
        # Rows below the threshold are plain causal rows -> vectorized tril fill.
        mask[:n_dense] = np.tril(np.ones((n_dense, win_len), dtype=np.bool_))
    for row in range(n_dense, win_len):           # verbatim reference semantics
        index = row
        while index >= 0:
            if index - log_l + 1 < 0:
                mask[row, :index] = True
                break
            mask[row, index - log_l + 1: index + 1] = True
            for i in range(log_l):
                new_index = index - log_l + 1 - 2 ** i
                if (index - new_index) <= sub_len and new_index >= 0:
                    mask[row, new_index] = True
            index -= sub_len
    return mask


@functools.lru_cache(maxsize=8)
def _mask_and_tables(L, S, tq, tk):
    """int8 mask + per-query-block active-key-block table / counts (SMEM prefetch)."""
    m = _log_mask_np(L, S)[:L, :S]                      # (L, S) bool, L == S
    n_q, n_k = L // tq, S // tk
    blk = m.reshape(n_q, tq, n_k, tk).any(axis=(1, 3))  # (n_q, n_k) block-nonzero map
    counts = np.maximum(blk.sum(axis=1), 1).astype(np.int32)
    max_active = int(counts.max())
    table = np.zeros((n_q, max_active), dtype=np.int32)
    for qi in range(n_q):
        idx = np.flatnonzero(blk[qi]).astype(np.int32)
        if idx.size == 0:                               # cannot happen (diag set), safety
            idx = np.zeros((1,), np.int32)
        table[qi, :idx.size] = idx
        table[qi, idx.size:] = idx[-1]                  # pad with a valid block index
    return (jnp.asarray(m, dtype=jnp.int8), jnp.asarray(table),
            jnp.asarray(counts), max_active)


# ----------------------------------------------------------------------------
# Kernel.  grid = (n_q, B, H//G, max_active); last axis is the online-softmax
# reduction over *active* key blocks only (data-dependent index maps).
# ----------------------------------------------------------------------------
def _attn_kernel(tbl_ref, cnt_ref,                      # SMEM scalar-prefetch refs
                 q_ref, k_ref, v_ref, mask_ref,         # inputs
                 o_ref,                                 # output
                 qs_sc, m_sc, l_sc, acc_sc,             # VMEM scratch
                 *, scale, G, E, D):
    del tbl_ref                                         # only used in index_maps
    qi = pl.program_id(0)
    ki = pl.program_id(3)
    nk = pl.num_programs(3)

    @pl.when(ki == 0)
    def _init():
        # Scale Q in f32 once per Q block and stash per-head bf16 slabs in scratch so
        # the per-ki steps pay neither the rescale nor the Q lane-slice relayout.
        q_all = q_ref[0] * scale                        # (tq, G*E) f32
        for g in range(G):
            qs_sc[g] = q_all[:, g * E:(g + 1) * E].astype(qs_sc.dtype)
        m_sc[...] = jnp.full(m_sc.shape, -jnp.inf, jnp.float32)
        l_sc[...] = jnp.zeros(l_sc.shape, jnp.float32)
        acc_sc[...] = jnp.zeros(acc_sc.shape, jnp.float32)

    @pl.when(ki < cnt_ref[qi])                          # skip padded (inactive) steps
    def _compute():
        neg = jnp.float32(-1.0e9 * scale)               # reference: scale*(raw*m -1e9*(1-m))
        mask = mask_ref[...] != 0                       # (tq, tk) bool (int8 input)
        k_all = k_ref[0]                                # (tk, G*E) compute dtype (bf16)
        v_all = v_ref[0]                                # (tk, G*D) compute dtype (bf16)

        # TODO(synk): per-head 32-lane slices of k_all/v_all relayout each step; a
        # pltpu.einshape head split would remove it but is left out for robustness.
        for g in range(G):                              # static unroll over head group
            q = qs_sc[g]                                # (tq, E), pre-scaled bf16
            k = k_all[:, g * E:(g + 1) * E]             # (tk, E)
            v = v_all[:, g * D:(g + 1) * D]             # (tk, D)

            # Contract on the last dims directly (no k.T relayout); f32 MXU accumulate.
            s = jax.lax.dot_general(q, k,
                                    dimension_numbers=(((1,), (1,)), ((), ())),
                                    preferred_element_type=jnp.float32)   # (tq, tk)
            s = jnp.where(mask, s, neg)

            m_prev = m_sc[g]                                              # (tq, 1)
            m_new = jnp.maximum(m_prev, jnp.max(s, axis=-1, keepdims=True))
            alpha = jnp.exp(m_prev - m_new)
            p = jnp.exp(s - m_new)                                        # (tq, tk) f32
            l_sc[g] = alpha * l_sc[g] + jnp.sum(p, axis=-1, keepdims=True)
            acc_sc[g] = alpha * acc_sc[g] + jnp.dot(
                p.astype(v.dtype), v, preferred_element_type=jnp.float32)
            m_sc[g] = m_new

    @pl.when(ki == nk - 1)
    def _finalize():
        # Assemble the full lane-dense (tq, G*D) slab and do ONE unmasked store.
        outs = []
        for g in range(G):
            inv = pl.reciprocal(l_sc[g], approx=True)                     # EUP slot
            outs.append((acc_sc[g] * inv).astype(o_ref.dtype))
        o_ref[0] = jnp.concatenate(outs, axis=-1)


# ----------------------------------------------------------------------------
# Tile / head-group selection.
# ----------------------------------------------------------------------------
def _pick_tile(n, target, align):
    """Largest multiple of `align` dividing n and <= target, else full n (always legal)."""
    best = None
    t = align
    while t <= min(n, target):
        if n % t == 0:
            best = t
        t += align
    return best if best is not None else n


def _pick_head_group(H, E, D, max_lanes=1024):
    """Divisor G of H giving lane-aligned (G*E, G*D) slabs within a lane budget."""
    if H * max(E, D) <= max_lanes:
        return H                                        # full head dim: always legal block
    for G in range(H, 0, -1):
        if H % G:
            continue
        if (G * E) % 128 == 0 and (G * D) % 128 == 0 and G * max(E, D) <= max_lanes:
            return G
    return H


# ----------------------------------------------------------------------------
# Wrapper.
# ----------------------------------------------------------------------------
def multi_wavelet_prob_attention(queries, keys, values, attn_mask=None, scale=None,
                                 tq_target=256, tk_target=1024):
    """queries: (B, L, H, E), keys: (B, S, H, E), values: (B, S, H, D).
    Returns (V, None) with V: (B, L, H, D)."""
    del attn_mask                                       # mask is the static log-sparse one
    B, L, H, E = queries.shape
    _, S, _, D = values.shape
    if L != S:
        raise ValueError("log-sparse mask path assumes self-attention (L == S); "
                         f"got L={L}, S={S}")
    scale = float(scale) if scale is not None else 1.0 / math.sqrt(E)

    # MXU compute dtype: bf16 when inputs are f32 (v6e/v7x bf16 MXU is several x faster
    # than f32; accumulation stays f32).  K/V are cast wrapper-side (halves their DMA
    # bytes; they are re-read across query blocks).  Q stays in its input dtype and is
    # scaled+cast once per Q block inside the kernel.
    cdt = jnp.bfloat16 if queries.dtype == jnp.float32 else queries.dtype

    # Free reshapes only — no HBM transposes.  Heads stay interleaved on the lane axis.
    q = queries.reshape(B, L, H * E)
    k = keys.astype(cdt).reshape(B, S, H * E)
    v = values.astype(cdt).reshape(B, S, H * D)

    G = _pick_head_group(H, E, D)
    # tq alignment 32: the int8 mask block's sublane dim is tq (int8 needs 32-sublane
    # granularity); 32 also satisfies f32 (8) and bf16 (16).  tk alignment 128 (lanes).
    tq = _pick_tile(L, tq_target, 32)
    tk = _pick_tile(S, tk_target, 128)
    n_q = L // tq

    mask_i8, tbl, cnt, max_active = _mask_and_tables(L, S, tq, tk)

    # Largest parallel axis (n_q) leads the grid (v7x megacore sharding); the active-key
    # reduction axis is last / "arbitrary".
    grid = (n_q, B, H // G, max_active)

    # VMEM budget: double-buffered blocks + persistent scratch (lane-padded), 2x margin.
    itm = lambda dt: jnp.dtype(dt).itemsize
    blk_bytes = (2 * tq * G * E * itm(queries.dtype)    # q
                 + 2 * tk * G * E * itm(cdt)            # k
                 + 2 * tk * G * D * itm(cdt)            # v
                 + 2 * tq * tk                          # mask (int8)
                 + 2 * tq * G * D * itm(queries.dtype)) # out
    scr_bytes = (G * tq * max(E, 128) * itm(cdt)        # q scratch
                 + 2 * G * tq * 128 * 4                 # m, l (lane padded to 128)
                 + G * tq * max(D, 128) * 4)            # acc
    vmem_limit = int(min(64 * 2**20, max(32 * 2**20, 2 * (blk_bytes + scr_bytes))))

    kernel = functools.partial(_attn_kernel, scale=scale, G=G, E=E, D=D)

    out = pl.pallas_call(
        kernel,
        out_shape=jax.ShapeDtypeStruct((B, L, H * D), queries.dtype),
        grid_spec=pltpu.PrefetchScalarGridSpec(
            num_scalar_prefetch=2,                      # (table, counts) -> SMEM
            grid=grid,
            in_specs=[
                pl.BlockSpec((1, tq, G * E),
                             lambda qi, b, g, ki, tbl, cnt: (b, qi, g)),
                pl.BlockSpec((1, tk, G * E),
                             lambda qi, b, g, ki, tbl, cnt: (b, tbl[qi, ki], g)),
                pl.BlockSpec((1, tk, G * D),
                             lambda qi, b, g, ki, tbl, cnt: (b, tbl[qi, ki], g)),
                pl.BlockSpec((tq, tk),
                             lambda qi, b, g, ki, tbl, cnt: (qi, tbl[qi, ki])),
            ],
            out_specs=pl.BlockSpec((1, tq, G * D),
                                   lambda qi, b, g, ki, tbl, cnt: (b, qi, g)),
            scratch_shapes=[
                pltpu.VMEM((G, tq, E), cdt),            # pre-scaled / pre-split Q
                pltpu.VMEM((G, tq, 1), jnp.float32),    # running row max
                pltpu.VMEM((G, tq, 1), jnp.float32),    # running softmax denom
                pltpu.VMEM((G, tq, D), jnp.float32),    # output accumulator
            ],
        ),
        compiler_params=pltpu.CompilerParams(
            dimension_semantics=("parallel", "parallel", "parallel", "arbitrary"),
            vmem_limit_bytes=vmem_limit,
        ),
    )(tbl, cnt, q, k, v, mask_i8)

    V = out.reshape(B, L, H, D)                         # free reshape: layout matches
    return V, None


# ----------------------------------------------------------------------------
# Pure-JAX reference (masked-attention forward semantics, f32 throughout).
# ----------------------------------------------------------------------------
def _reference(queries, keys, values, scale=None):
    B, L, H, E = queries.shape
    _, S, _, D = values.shape
    scale = scale if scale is not None else 1.0 / math.sqrt(E)
    scores = jnp.einsum('blhe,bshe->bhls',
                        queries.astype(jnp.float32), keys.astype(jnp.float32))
    m = jnp.asarray(_log_mask_np(L, S)[:L, :S], dtype=jnp.float32)[None, None]
    scores = scores * m + (-1.0e9) * (1.0 - m)
    A = jax.nn.softmax(scale * scores, axis=-1)
    return jnp.einsum('bhls,bshd->blhd', A, values.astype(jnp.float32))


if __name__ == "__main__":
    key = jax.random.PRNGKey(0)
    B, L, S, H, E, D = 2, 8, 8, 4, 32, 32
    kq, kk, kv = jax.random.split(key, 3)
    queries = jax.random.normal(kq, (B, L, H, E), dtype=jnp.float32)
    keys = jax.random.normal(kk, (B, S, H, E), dtype=jnp.float32)
    values = jax.random.normal(kv, (B, S, H, D), dtype=jnp.float32)

    V, A = multi_wavelet_prob_attention(queries, keys, values, None)
    V = jax.block_until_ready(V)

    V_ref = _reference(queries, keys, values)
    # Tolerance accounts for bf16 MXU inputs (K, V, scaled Q, p) + approx reciprocal;
    # accumulation is f32 so the error stays ~1e-2 absolute at these magnitudes.
    np.testing.assert_allclose(np.asarray(V), np.asarray(V_ref), rtol=3e-2, atol=3e-2)
    print("KERNEL_OK")
</pallas_src>

<mosaic_0001>
module attributes {stable_mosaic.version = 11 : i64} {
  func.func @_attn_kernel(%arg0: i32, %arg1: i32, %arg2: i32, %arg3: i32, %arg4: memref<1x1xi32, #tpu.memory_space<smem>>, %arg5: memref<1xi32, #tpu.memory_space<smem>>, %arg6: memref<1x8x128xf32, #tpu.memory_space<vmem>>, %arg7: memref<1x8x128xbf16, #tpu.memory_space<vmem>>, %arg8: memref<1x8x128xbf16, #tpu.memory_space<vmem>>, %arg9: memref<8x8xi8, #tpu.memory_space<vmem>>, %arg10: memref<1x8x128xf32, #tpu.memory_space<vmem>>, %arg11: memref<4x8x32xbf16, #tpu.memory_space<vmem>>, %arg12: memref<4x8x1xf32, #tpu.memory_space<vmem>>, %arg13: memref<4x8x1xf32, #tpu.memory_space<vmem>>, %arg14: memref<4x8x32xf32, #tpu.memory_space<vmem>>) attributes {dimension_semantics = [#tpu.dimension_semantics<parallel>, #tpu.dimension_semantics<parallel>, #tpu.dimension_semantics<parallel>, #tpu.dimension_semantics<arbitrary>], iteration_bounds = array<i64: 1, 2, 1, 1>, scalar_prefetch = 2 : i64, scratch_operands = 4 : i64, tpu.core_type = #tpu.core_type<tc>, window_params = [{transform_indices = @transform_0, window_bounds = array<i64: 1, 8, 128>}, {transform_indices = @transform_1, window_bounds = array<i64: 1, 8, 128>}, {transform_indices = @transform_2, window_bounds = array<i64: 1, 8, 128>}, {transform_indices = @transform_3, window_bounds = array<i64: 8, 8>}, {transform_indices = @transform_4, window_bounds = array<i64: 1, 8, 128>}]} {
    %c0_i32 = arith.constant 0 : i32
    %0 = arith.cmpi eq, %arg3, %c0_i32 : i32
    %1 = arith.extui %0 : i1 to i32
    %c0_i32_0 = arith.constant 0 : i32
    %2 = arith.cmpi ne, %1, %c0_i32_0 : i32
    scf.if %2 {
      %c0 = arith.constant 0 : index
      %c0_4 = arith.constant 0 : index
      %c0_5 = arith.constant 0 : index
      %11 = vector.load %arg6[%c0, %c0_4, %c0_5] : memref<1x8x128xf32, #tpu.memory_space<vmem>>, vector<1x8x128xf32>
      %12 = vector.shape_cast %11 : vector<1x8x128xf32> to vector<8x128xf32>
      %cst = arith.constant 0.176776692 : f32
      %13 = vector.broadcast %cst : f32 to vector<8x128xf32>
      %14 = arith.mulf %12, %13 : vector<8x128xf32>
      %15 = vector.extract_strided_slice %14 {offsets = [0, 0], sizes = [8, 32], strides = [1, 1]} : vector<8x128xf32> to vector<8x32xf32>
      %16 = arith.truncf %15 : vector<8x32xf32> to vector<8x32xbf16>
      %c0_6 = arith.constant 0 : index
      %c0_7 = arith.constant 0 : index
      %c0_8 = arith.constant 0 : index
      %17 = vector.load %arg11[%c0_6, %c0_7, %c0_8] : memref<4x8x32xbf16, #tpu.memory_space<vmem>>, vector<1x8x32xbf16>
      %18 = vector.shape_cast %17 : vector<1x8x32xbf16> to vector<8x32xbf16>
      %19 = vector.shape_cast %16 : vector<8x32xbf16> to vector<1x8x32xbf16>
      tpu.vector_store %arg11[%c0_6, %c0_7, %c0_8], %19 {strides = array<i32>} : memref<4x8x32xbf16, #tpu.memory_space<vmem>>, vector<1x8x32xbf16>,
      %20 = vector.extract_strided_slice %14 {offsets = [0, 32], sizes = [8, 32], strides = [1, 1]} : vector<8x128xf32> to vector<8x32xf32>
      %21 = arith.truncf %20 : vector<8x32xf32> to vector<8x32xbf16>
      %c1 = arith.constant 1 : index
      %c0_9 = arith.constant 0 : index
      %c0_10 = arith.constant 0 : index
      %22 = vector.load %arg11[%c1, %c0_9, %c0_10] : memref<4x8x32xbf16, #tpu.memory_space<vmem>>, vector<1x8x32xbf16>
      %23 = vector.shape_cast %22 : vector<1x8x32xbf16> to vector<8x32xbf16>
      %24 = vector.shape_cast %21 : vector<8x32xbf16> to vector<1x8x32xbf16>
      tpu.vector_store %arg11[%c1, %c0_9, %c0_10], %24 {strides = array<i32>} : memref<4x8x32xbf16, #tpu.memory_space<vmem>>, vector<1x8x32xbf16>,
      %25 = vector.extract_strided_slice %14 {offsets = [0, 64], sizes = [8, 32], strides = [1, 1]} : vector<8x128xf32> to vector<8x32xf32>
      %26 = arith.truncf %25 : vector<8x32xf32> to vector<8x32xbf16>
      %c2 = arith.constant 2 : index
      %c0_11 = arith.constant 0 : index
      %c0_12 = arith.constant 0 : index
      %27 = vector.load %arg11[%c2, %c0_11, %c0_12] : memref<4x8x32xbf16, #tpu.memory_space<vmem>>, vector<1x8x32xbf16>
      %28 = vector.shape_cast %27 : vector<1x8x32xbf16> to vector<8x32xbf16>
      %29 = vector.shape_cast %26 : vector<8x32xbf16> to vector<1x8x32xbf16>
      tpu.vector_store %arg11[%c2, %c0_11, %c0_12], %29 {strides = array<i32>} : memref<4x8x32xbf16, #tpu.memory_space<vmem>>, vector<1x8x32xbf16>,
      %30 = vector.extract_strided_slice %14 {offsets = [0, 96], sizes = [8, 32], strides = [1, 1]} : vector<8x128xf32> to vector<8x32xf32>
      %31 = arith.truncf %30 : vector<8x32xf32> to vector<8x32xbf16>
      %c3 = arith.constant 3 : index
      %c0_13 = arith.constant 0 : index
      %c0_14 = arith.constant 0 : index
      %32 = vector.load %arg11[%c3, %c0_13, %c0_14] : memref<4x8x32xbf16, #tpu.memory_space<vmem>>, vector<1x8x32xbf16>
      %33 = vector.shape_cast %32 : vector<1x8x32xbf16> to vector<8x32xbf16>
      %34 = vector.shape_cast %31 : vector<8x32xbf16> to vector<1x8x32xbf16>
      tpu.vector_store %arg11[%c3, %c0_13, %c0_14], %34 {strides = array<i32>} : memref<4x8x32xbf16, #tpu.memory_space<vmem>>, vector<1x8x32xbf16>,
      %cst_15 = arith.constant 0xFF800000 : f32
      %35 = vector.broadcast %cst_15 : f32 to vector<4x8x1xf32>
      %c0_16 = arith.constant 0 : index
      %c0_17 = arith.constant 0 : index
      %c0_18 = arith.constant 0 : index
      %36 = vector.load %arg12[%c0_16, %c0_17, %c0_18] : memref<4x8x1xf32, #tpu.memory_space<vmem>>, vector<4x8x1xf32>
      tpu.vector_store %arg12[%c0_16, %c0_17, %c0_18], %35 {strides = array<i32>} : memref<4x8x1xf32, #tpu.memory_space<vmem>>, vector<4x8x1xf32>,
      %cst_19 = arith.constant 0.000000e+00 : f32
      %37 = vector.broadcast %cst_19 : f32 to vector<4x8x1xf32>
      %c0_20 = arith.constant 0 : index
      %c0_21 = arith.constant 0 : index
      %c0_22 = arith.constant 0 : index
      %38 = vector.load %arg13[%c0_20, %c0_21, %c0_22] : memref<4x8x1xf32, #tpu.memory_space<vmem>>, vector<4x8x1xf32>
      tpu.vector_store %arg13[%c0_20, %c0_21, %c0_22], %37 {strides = array<i32>} : memref<4x8x1xf32, #tpu.memory_space<vmem>>, vector<4x8x1xf32>,
      %cst_23 = arith.constant 0.000000e+00 : f32
      %39 = vector.broadcast %cst_23 : f32 to vector<4x8x32xf32>
      %c0_24 = arith.constant 0 : index
      %c0_25 = arith.constant 0 : index
      %c0_26 = arith.constant 0 : index
      %40 = vector.load %arg14[%c0_24, %c0_25, %c0_26] : memref<4x8x32xf32, #tpu.memory_space<vmem>>, vector<4x8x32xf32>
      tpu.vector_store %arg14[%c0_24, %c0_25, %c0_26], %39 {strides = array<i32>} : memref<4x8x32xf32, #tpu.memory_space<vmem>>, vector<4x8x32xf32>,
    } else {
    }
    %3 = arith.index_cast %arg0 : i32 to index
    %4 = memref.load %arg5[%3] : memref<1xi32, #tpu.memory_space<smem>>
    %5 = arith.cmpi slt, %arg3, %4 : i32
    %6 = arith.extui %5 : i1 to i32
    %c0_i32_1 = arith.constant 0 : i32
    %7 = arith.cmpi ne, %6, %c0_i32_1 : i32
    scf.if %7 {
      %c0 = arith.constant 0 : index
      %c0_4 = arith.constant 0 : index
      %11 = vector.load %arg9[%c0, %c0_4] : memref<8x8xi8, #tpu.memory_space<vmem>>, vector<8x8xi8>
      %c0_i8 = arith.constant 0 : i8
      %12 = vector.broadcast %c0_i8 : i8 to vector<8x8xi8>
      %13 = arith.cmpi ne, %11, %12 : vector<8x8xi8>
      %c0_5 = arith.constant 0 : index
      %c0_6 = arith.constant 0 : index
      %c0_7 = arith.constant 0 : index
      %14 = vector.load %arg7[%c0_5, %c0_6, %c0_7] : memref<1x8x128xbf16, #tpu.memory_space<vmem>>, vector<1x8x128xbf16>
      %15 = vector.shape_cast %14 : vector<1x8x128xbf16> to vector<8x128xbf16>
      %c0_8 = arith.constant 0 : index
      %c0_9 = arith.constant 0 : index
      %c0_10 = arith.constant 0 : index
      %16 = vector.load %arg8[%c0_8, %c0_9, %c0_10] : memref<1x8x128xbf16, #tpu.memory_space<vmem>>, vector<1x8x128xbf16>
      %17 = vector.shape_cast %16 : vector<1x8x128xbf16> to vector<8x128xbf16>
      %c0_11 = arith.constant 0 : index
      %c0_12 = arith.constant 0 : index
      %c0_13 = arith.constant 0 : index
      %18 = vector.load %arg11[%c0_11, %c0_12, %c0_13] : memref<4x8x32xbf16, #tpu.memory_space<vmem>>, vector<1x8x32xbf16>
      %19 = vector.shape_cast %18 : vector<1x8x32xbf16> to vector<8x32xbf16>
      %20 = vector.extract_strided_slice %15 {offsets = [0, 0], sizes = [8, 32], strides = [1, 1]} : vector<8x128xbf16> to vector<8x32xbf16>
      %21 = vector.extract_strided_slice %17 {offsets = [0, 0], sizes = [8, 32], strides = [1, 1]} : vector<8x128xbf16> to vector<8x32xbf16>
      %cst = arith.constant dense<0.000000e+00> : vector<8x8xf32>
      %22 = tpu.matmul %19, %20, %cst {dimension_numbers = #tpu.dot_dimension_numbers<[1], [1], [0], [0], [0, 0, 1, 0], [], []>} : vector<8x32xbf16>, vector<8x32xbf16>, vector<8x8xf32> -> vector<8x8xf32>
      %cst_14 = arith.constant 0xCD28965F : f32
      %23 = vector.broadcast %cst_14 : f32 to vector<8x8xf32>
      %24 = arith.select %13, %22, %23 : vector<8x8xi1>, vector<8x8xf32>
      %c0_15 = arith.constant 0 : index
      %c0_16 = arith.constant 0 : index
      %c0_17 = arith.constant 0 : index
      %25 = vector.load %arg12[%c0_15, %c0_16, %c0_17] : memref<4x8x1xf32, #tpu.memory_space<vmem>>, vector<1x8x1xf32>
      %26 = vector.shape_cast %25 : vector<1x8x1xf32> to vector<8x1xf32>
      %cst_18 = arith.constant dense<0xFF800000> : vector<8xf32>
      %27 = vector.multi_reduction <maximumf>, %24, %cst_18 [1] : vector<8x8xf32> to vector<8xf32>
      %28 = vector.shape_cast %27 : vector<8xf32> to vector<8x1xf32>
      %29 = arith.maximumf %26, %28 : vector<8x1xf32>
      %30 = arith.subf %26, %29 : vector<8x1xf32>
      %31 = math.exp %30 : vector<8x1xf32>
      %32 = vector.broadcast %29 : vector<8x1xf32> to vector<8x8xf32>
      %33 = arith.subf %24, %32 : vector<8x8xf32>
      %34 = math.exp %33 : vector<8x8xf32>
      %c0_19 = arith.constant 0 : index
      %c0_20 = arith.constant 0 : index
      %c0_21 = arith.constant 0 : index
      %35 = vector.load %arg13[%c0_19, %c0_20, %c0_21] : memref<4x8x1xf32, #tpu.memory_space<vmem>>, vector<1x8x1xf32>
      %36 = vector.shape_cast %35 : vector<1x8x1xf32> to vector<8x1xf32>
      %37 = arith.mulf %31, %36 : vector<8x1xf32>
      %cst_22 = arith.constant dense<0.000000e+00> : vector<8xf32>
      %38 = vector.multi_reduction <add>, %34, %cst_22 [1] : vector<8x8xf32> to vector<8xf32>
      %39 = vector.shape_cast %38 : vector<8xf32> to vector<8x1xf32>
      %40 = arith.addf %37, %39 : vector<8x1xf32>
      %c0_23 = arith.constant 0 : index
      %c0_24 = arith.constant 0 : index
      %c0_25 = arith.constant 0 : index
      %41 = vector.load %arg13[%c0_23, %c0_24, %c0_25] : memref<4x8x1xf32, #tpu.memory_space<vmem>>, vector<1x8x1xf32>
      %42 = vector.shape_cast %41 : vector<1x8x1xf32> to vector<8x1xf32>
      %43 = vector.shape_cast %40 : vector<8x1xf32> to vector<1x8x1xf32>
      tpu.vector_store %arg13[%c0_23, %c0_24, %c0_25], %43 {strides = array<i32>} : memref<4x8x1xf32, #tpu.memory_space<vmem>>, vector<1x8x1xf32>,
      %c0_26 = arith.constant 0 : index
      %c0_27 = arith.constant 0 : index
      %c0_28 = arith.constant 0 : index
      %44 = vector.load %arg14[%c0_26, %c0_27, %c0_28] : memref<4x8x32xf32, #tpu.memory_space<vmem>>, vector<1x8x32xf32>
      %45 = vector.shape_cast %44 : vector<1x8x32xf32> to vector<8x32xf32>
      %46 = vector.broadcast %31 : vector<8x1xf32> to vector<8x32xf32>
      %47 = arith.mulf %46, %45 : vector<8x32xf32>
      %48 = arith.truncf %34 : vector<8x8xf32> to vector<8x8xbf16>
      %cst_29 = arith.constant dense<0.000000e+00> : vector<8x32xf32>
      %49 = tpu.matmul %48, %21, %cst_29 {dimension_numbers = #tpu.dot_dimension_numbers<[1], [0], [0], [1], [0, 0, 1, 1], [], []>} : vector<8x8xbf16>, vector<8x32xbf16>, vector<8x32xf32> -> vector<8x32xf32>
      %50 = arith.addf %47, %49 : vector<8x32xf32>
      %c0_30 = arith.constant 0 : index
      %c0_31 = arith.constant 0 : index
      %c0_32 = arith.constant 0 : index
      %51 = vector.load %arg14[%c0_30, %c0_31, %c0_32] : memref<4x8x32xf32, #tpu.memory_space<vmem>>, vector<1x8x32xf32>
      %52 = vector.shape_cast %51 : vector<1x8x32xf32> to vector<8x32xf32>
      %53 = vector.shape_cast %50 : vector<8x32xf32> to vector<1x8x32xf32>
      tpu.vector_store %arg14[%c0_30, %c0_31, %c0_32], %53 {strides = array<i32>} : memref<4x8x32xf32, #tpu.memory_space<vmem>>, vector<1x8x32xf32>,
      %c0_33 = arith.constant 0 : index
      %c0_34 = arith.constant 0 : index
      %c0_35 = arith.constant 0 : index
      %54 = vector.load %arg12[%c0_33, %c0_34, %c0_35] : memref<4x8x1xf32, #tpu.memory_space<vmem>>, vector<1x8x1xf32>
      %55 = vector.shape_cast %54 : vector<1x8x1xf32> to vector<8x1xf32>
      %56 = vector.shape_cast %29 : vector<8x1xf32> to vector<1x8x1xf32>
      tpu.vector_store %arg12[%c0_33, %c0_34, %c0_35], %56 {strides = array<i32>} : memref<4x8x1xf32, #tpu.memory_space<vmem>>, vector<1x8x1xf32>,
      %c1 = arith.constant 1 : index
      %c0_36 = arith.constant 0 : index
      %c0_37 = arith.constant 0 : index
      %57 = vector.load %arg11[%c1, %c0_36, %c0_37] : memref<4x8x32xbf16, #tpu.memory_space<vmem>>, vector<1x8x32xbf16>
      %58 = vector.shape_cast %57 : vector<1x8x32xbf16> to vector<8x32xbf16>
      %59 = vector.extract_strided_slice %15 {offsets = [0, 32], sizes = [8, 32], strides = [1, 1]} : vector<8x128xbf16> to vector<8x32xbf16>
      %60 = vector.extract_strided_slice %17 {offsets = [0, 32], sizes = [8, 32], strides = [1, 1]} : vector<8x128xbf16> to vector<8x32xbf16>
      %cst_38 = arith.constant dense<0.000000e+00> : vector<8x8xf32>
      %61 = tpu.matmul %58, %59, %cst_38 {dimension_numbers = #tpu.dot_dimension_numbers<[1], [1], [0], [0], [0, 0, 1, 0], [], []>} : vector<8x32xbf16>, vector<8x32xbf16>, vector<8x8xf32> -> vector<8x8xf32>
      %cst_39 = arith.constant 0xCD28965F : f32
      %62 = vector.broadcast %cst_39 : f32 to vector<8x8xf32>
      %63 = arith.select %13, %61, %62 : vector<8x8xi1>, vector<8x8xf32>
      %c1_40 = arith.constant 1 : index
      %c0_41 = arith.constant 0 : index
      %c0_42 = arith.constant 0 : index
      %64 = vector.load %arg12[%c1_40, %c0_41, %c0_42] : memref<4x8x1xf32, #tpu.memory_space<vmem>>, vector<1x8x1xf32>
      %65 = vector.shape_cast %64 : vector<1x8x1xf32> to vector<8x1xf32>
      %cst_43 = arith.constant dense<0xFF800000> : vector<8xf32>
      %66 = vector.multi_reduction <maximumf>, %63, %cst_43 [1] : vector<8x8xf32> to vector<8xf32>
      %67 = vector.shape_cast %66 : vector<8xf32> to vector<8x1xf32>
      %68 = arith.maximumf %65, %67 : vector<8x1xf32>
      %69 = arith.subf %65, %68 : vector<8x1xf32>
      %70 = math.exp %69 : vector<8x1xf32>
      %71 = vector.broadcast %68 : vector<8x1xf32> to vector<8x8xf32>
      %72 = arith.subf %63, %71 : vector<8x8xf32>
      %73 = math.exp %72 : vector<8x8xf32>
      %c1_44 = arith.constant 1 : index
      %c0_45 = arith.constant 0 : index
      %c0_46 = arith.constant 0 : index
      %74 = vector.load %arg13[%c1_44, %c0_45, %c0_46] : memref<4x8x1xf32, #tpu.memory_space<vmem>>, vector<1x8x1xf32>
      %75 = vector.shape_cast %74 : vector<1x8x1xf32> to vector<8x1xf32>
      %76 = arith.mulf %70, %75 : vector<8x1xf32>
      %cst_47 = arith.constant dense<0.000000e+00> : vector<8xf32>
      %77 = vector.multi_reduction <add>, %73, %cst_47 [1] : vector<8x8xf32> to vector<8xf32>
      %78 = vector.shape_cast %77 : vector<8xf32> to vector<8x1xf32>
      %79 = arith.addf %76, %78 : vector<8x1xf32>
      %c1_48 = arith.constant 1 : index
      %c0_49 = arith.constant 0 : index
      %c0_50 = arith.constant 0 : index
      %80 = vector.load %arg13[%c1_48, %c0_49, %c0_50] : memref<4x8x1xf32, #tpu.memory_space<vmem>>, vector<1x8x1xf32>
      %81 = vector.shape_cast %80 : vector<1x8x1xf32> to vector<8x1xf32>
      %82 = vector.shape_cast %79 : vector<8x1xf32> to vector<1x8x1xf32>
      tpu.vector_store %arg13[%c1_48, %c0_49, %c0_50], %82 {strides = array<i32>} : memref<4x8x1xf32, #tpu.memory_space<vmem>>, vector<1x8x1xf32>,
      %c1_51 = arith.constant 1 : index
      %c0_52 = arith.constant 0 : index
      %c0_53 = arith.constant 0 : index
      %83 = vector.load %arg14[%c1_51, %c0_52, %c0_53] : memref<4x8x32xf32, #tpu.memory_space<vmem>>, vector<1x8x32xf32>
      %84 = vector.shape_cast %83 : vector<1x8x32xf32> to vector<8x32xf32>
      %85 = vector.broadcast %70 : vector<8x1xf32> to vector<8x32xf32>
      %86 = arith.mulf %85, %84 : vector<8x32xf32>
      %87 = arith.truncf %73 : vector<8x8xf32> to vector<8x8xbf16>
      %cst_54 = arith.constant dense<0.000000e+00> : vector<8x32xf32>
      %88 = tpu.matmul %87, %60, %cst_54 {dimension_numbers = #tpu.dot_dimension_numbers<[1], [0], [0], [1], [0, 0, 1, 1], [], []>} : vector<8x8xbf16>, vector<8x32xbf16>, vector<8x32xf32> -> vector<8x32xf32>
      %89 = arith.addf %86, %88 : vector<8x32xf32>
      %c1_55 = arith.constant 1 : index
      %c0_56 = arith.constant 0 : index
      %c0_57 = arith.constant 0 : index
      %90 = vector.load %arg14[%c1_55, %c0_56, %c0_57] : memref<4x8x32xf32, #tpu.memory_space<vmem>>, vector<1x8x32xf32>
      %91 = vector.shape_cast %90 : vector<1x8x32xf32> to vector<8x32xf32>
      %92 = vector.shape_cast %89 : vector<8x32xf32> to vector<1x8x32xf32>
      tpu.vector_store %arg14[%c1_55, %c0_56, %c0_57], %92 {strides = array<i32>} : memref<4x8x32xf32, #tpu.memory_space<vmem>>, vector<1x8x32xf32>,
      %c1_58 = arith.constant 1 : index
      %c0_59 = arith.constant 0 : index
      %c0_60 = arith.constant 0 : index
      %93 = vector.load %arg12[%c1_58, %c0_59, %c0_60] : memref<4x8x1xf32, #tpu.memory_space<vmem>>, vector<1x8x1xf32>
      %94 = vector.shape_cast %93 : vector<1x8x1xf32> to vector<8x1xf32>
      %95 = vector.shape_cast %68 : vector<8x1xf32> to vector<1x8x1xf32>
      tpu.vector_store %arg12[%c1_58, %c0_59, %c0_60], %95 {strides = array<i32>} : memref<4x8x1xf32, #tpu.memory_space<vmem>>, vector<1x8x1xf32>,
      %c2 = arith.constant 2 : index
      %c0_61 = arith.constant 0 : index
      %c0_62 = arith.constant 0 : index
      %96 = vector.load %arg11[%c2, %c0_61, %c0_62] : memref<4x8x32xbf16, #tpu.memory_space<vmem>>, vector<1x8x32xbf16>
      %97 = vector.shape_cast %96 : vector<1x8x32xbf16> to vector<8x32xbf16>
      %98 = vector.extract_strided_slice %15 {offsets = [0, 64], sizes = [8, 32], strides = [1, 1]} : vector<8x128xbf16> to vector<8x32xbf16>
      %99 = vector.extract_strided_slice %17 {offsets = [0, 64], sizes = [8, 32], strides = [1, 1]} : vector<8x128xbf16> to vector<8x32xbf16>
      %cst_63 = arith.constant dense<0.000000e+00> : vector<8x8xf32>
      %100 = tpu.matmul %97, %98, %cst_63 {dimension_numbers = #tpu.dot_dimension_numbers<[1], [1], [0], [0], [0, 0, 1, 0], [], []>} : vector<8x32xbf16>, vector<8x32xbf16>, vector<8x8xf32> -> vector<8x8xf32>
      %cst_64 = arith.constant 0xCD28965F : f32
      %101 = vector.broadcast %cst_64 : f32 to vector<8x8xf32>
      %102 = arith.select %13, %100, %101 : vector<8x8xi1>, vector<8x8xf32>
      %c2_65 = arith.constant 2 : index
      %c0_66 = arith.constant 0 : index
      %c0_67 = arith.constant 0 : index
      %103 = vector.load %arg12[%c2_65, %c0_66, %c0_67] : memref<4x8x1xf32, #tpu.memory_space<vmem>>, vector<1x8x1xf32>
      %104 = vector.shape_cast %103 : vector<1x8x1xf32> to vector<8x1xf32>
      %cst_68 = arith.constant dense<0xFF800000> : vector<8xf32>
      %105 = vector.multi_reduction <maximumf>, %102, %cst_68 [1] : vector<8x8xf32> to vector<8xf32>
      %106 = vector.shape_cast %105 : vector<8xf32> to vector<8x1xf32>
      %107 = arith.maximumf %104, %106 : vector<8x1xf32>
      %108 = arith.subf %104, %107 : vector<8x1xf32>
      %109 = math.exp %108 : vector<8x1xf32>
      %110 = vector.broadcast %107 : vector<8x1xf32> to vector<8x8xf32>
      %111 = arith.subf %102, %110 : vector<8x8xf32>
      %112 = math.exp %111 : vector<8x8xf32>
      %c2_69 = arith.constant 2 : index
      %c0_70 = arith.constant 0 : index
      %c0_71 = arith.constant 0 : index
      %113 = vector.load %arg13[%c2_69, %c0_70, %c0_71] : memref<4x8x1xf32, #tpu.memory_space<vmem>>, vector<1x8x1xf32>
      %114 = vector.shape_cast %113 : vector<1x8x1xf32> to vector<8x1xf32>
      %115 = arith.mulf %109, %114 : vector<8x1xf32>
      %cst_72 = arith.constant dense<0.000000e+00> : vector<8xf32>
      %116 = vector.multi_reduction <add>, %112, %cst_72 [1] : vector<8x8xf32> to vector<8xf32>
      %117 = vector.shape_cast %116 : vector<8xf32> to vector<8x1xf32>
      %118 = arith.addf %115, %117 : vector<8x1xf32>
      %c2_73 = arith.constant 2 : index
      %c0_74 = arith.constant 0 : index
      %c0_75 = arith.constant 0 : index
      %119 = vector.load %arg13[%c2_73, %c0_74, %c0_75] : memref<4x8x1xf32, #tpu.memory_space<vmem>>, vector<1x8x1xf32>
      %120 = vector.shape_cast %119 : vector<1x8x1xf32> to vector<8x1xf32>
      %121 = vector.shape_cast %118 : vector<8x1xf32> to vector<1x8x1xf32>
      tpu.vector_store %arg13[%c2_73, %c0_74, %c0_75], %121 {strides = array<i32>} : memref<4x8x1xf32, #tpu.memory_space<vmem>>, vector<1x8x1xf32>,
      %c2_76 = arith.constant 2 : index
      %c0_77 = arith.constant 0 : index
      %c0_78 = arith.constant 0 : index
      %122 = vector.load %arg14[%c2_76, %c0_77, %c0_78] : memref<4x8x32xf32, #tpu.memory_space<vmem>>, vector<1x8x32xf32>
      %123 = vector.shape_cast %122 : vector<1x8x32xf32> to vector<8x32xf32>
      %124 = vector.broadcast %109 : vector<8x1xf32> to vector<8x32xf32>
      %125 = arith.mulf %124, %123 : vector<8x32xf32>
      %126 = arith.truncf %112 : vector<8x8xf32> to vector<8x8xbf16>
      %cst_79 = arith.constant dense<0.000000e+00> : vector<8x32xf32>
      %127 = tpu.matmul %126, %99, %cst_79 {dimension_numbers = #tpu.dot_dimension_numbers<[1], [0], [0], [1], [0, 0, 1, 1], [], []>} : vector<8x8xbf16>, vector<8x32xbf16>, vector<8x32xf32> -> vector<8x32xf32>
      %128 = arith.addf %125, %127 : vector<8x32xf32>
      %c2_80 = arith.constant 2 : index
      %c0_81 = arith.constant 0 : index
      %c0_82 = arith.constant 0 : index
      %129 = vector.load %arg14[%c2_80, %c0_81, %c0_82] : memref<4x8x32xf32, #tpu.memory_space<vmem>>, vector<1x8x32xf32>
      %130 = vector.shape_cast %129 : vector<1x8x32xf32> to vector<8x32xf32>
      %131 = vector.shape_cast %128 : vector<8x32xf32> to vector<1x8x32xf32>
      tpu.vector_store %arg14[%c2_80, %c0_81, %c0_82], %131 {strides = array<i32>} : memref<4x8x32xf32, #tpu.memory_space<vmem>>, vector<1x8x32xf32>,
      %c2_83 = arith.constant 2 : index
      %c0_84 = arith.constant 0 : index
      %c0_85 = arith.constant 0 : index
      %132 = vector.load %arg12[%c2_83, %c0_84, %c0_85] : memref<4x8x1xf32, #tpu.memory_space<vmem>>, vector<1x8x1xf32>
      %133 = vector.shape_cast %132 : vector<1x8x1xf32> to vector<8x1xf32>
      %134 = vector.shape_cast %107 : vector<8x1xf32> to vector<1x8x1xf32>
      tpu.vector_store %arg12[%c2_83, %c0_84, %c0_85], %134 {strides = array<i32>} : memref<4x8x1xf32, #tpu.memory_space<vmem>>, vector<1x8x1xf32>,
      %c3 = arith.constant 3 : index
      %c0_86 = arith.constant 0 : index
      %c0_87 = arith.constant 0 : index
      %135 = vector.load %arg11[%c3, %c0_86, %c0_87] : memref<4x8x32xbf16, #tpu.memory_space<vmem>>, vector<1x8x32xbf16>
      %136 = vector.shape_cast %135 : vector<1x8x32xbf16> to vector<8x32xbf16>
      %137 = vector.extract_strided_slice %15 {offsets = [0, 96], sizes = [8, 32], strides = [1, 1]} : vector<8x128xbf16> to vector<8x32xbf16>
      %138 = vector.extract_strided_slice %17 {offsets = [0, 96], sizes = [8, 32], strides = [1, 1]} : vector<8x128xbf16> to vector<8x32xbf16>
      %cst_88 = arith.constant dense<0.000000e+00> : vector<8x8xf32>
      %139 = tpu.matmul %136, %137, %cst_88 {dimension_numbers = #tpu.dot_dimension_numbers<[1], [1], [0], [0], [0, 0, 1, 0], [], []>} : vector<8x32xbf16>, vector<8x32xbf16>, vector<8x8xf32> -> vector<8x8xf32>
      %cst_89 = arith.constant 0xCD28965F : f32
      %140 = vector.broadcast %cst_89 : f32 to vector<8x8xf32>
      %141 = arith.select %13, %139, %140 : vector<8x8xi1>, vector<8x8xf32>
      %c3_90 = arith.constant 3 : index
      %c0_91 = arith.constant 0 : index
      %c0_92 = arith.constant 0 : index
      %142 = vector.load %arg12[%c3_90, %c0_91, %c0_92] : memref<4x8x1xf32, #tpu.memory_space<vmem>>, vector<1x8x1xf32>
      %143 = vector.shape_cast %142 : vector<1x8x1xf32> to vector<8x1xf32>
      %cst_93 = arith.constant dense<0xFF800000> : vector<8xf32>
      %144 = vector.multi_reduction <maximumf>, %141, %cst_93 [1] : vector<8x8xf32> to vector<8xf32>
      %145 = vector.shape_cast %144 : vector<8xf32> to vector<8x1xf32>
      %146 = arith.maximumf %143, %145 : vector<8x1xf32>
      %147 = arith.subf %143, %146 : vector<8x1xf32>
      %148 = math.exp %147 : vector<8x1xf32>
      %149 = vector.broadcast %146 : vector<8x1xf32> to vector<8x8xf32>
      %150 = arith.subf %141, %149 : vector<8x8xf32>
      %151 = math.exp %150 : vector<8x8xf32>
      %c3_94 = arith.constant 3 : index
      %c0_95 = arith.constant 0 : index
      %c0_96 = arith.constant 0 : index
      %152 = vector.load %arg13[%c3_94, %c0_95, %c0_96] : memref<4x8x1xf32, #tpu.memory_space<vmem>>, vector<1x8x1xf32>
      %153 = vector.shape_cast %152 : vector<1x8x1xf32> to vector<8x1xf32>
      %154 = arith.mulf %148, %153 : vector<8x1xf32>
      %cst_97 = arith.constant dense<0.000000e+00> : vector<8xf32>
      %155 = vector.multi_reduction <add>, %151, %cst_97 [1] : vector<8x8xf32> to vector<8xf32>
      %156 = vector.shape_cast %155 : vector<8xf32> to vector<8x1xf32>
      %157 = arith.addf %154, %156 : vector<8x1xf32>
      %c3_98 = arith.constant 3 : index
      %c0_99 = arith.constant 0 : index
      %c0_100 = arith.constant 0 : index
      %158 = vector.load %arg13[%c3_98, %c0_99, %c0_100] : memref<4x8x1xf32, #tpu.memory_space<vmem>>, vector<1x8x1xf32>
      %159 = vector.shape_cast %158 : vector<1x8x1xf32> to vector<8x1xf32>
      %160 = vector.shape_cast %157 : vector<8x1xf32> to vector<1x8x1xf32>
      tpu.vector_store %arg13[%c3_98, %c0_99, %c0_100], %160 {strides = array<i32>} : memref<4x8x1xf32, #tpu.memory_space<vmem>>, vector<1x8x1xf32>,
      %c3_101 = arith.constant 3 : index
      %c0_102 = arith.constant 0 : index
      %c0_103 = arith.constant 0 : index
      %161 = vector.load %arg14[%c3_101, %c0_102, %c0_103] : memref<4x8x32xf32, #tpu.memory_space<vmem>>, vector<1x8x32xf32>
      %162 = vector.shape_cast %161 : vector<1x8x32xf32> to vector<8x32xf32>
      %163 = vector.broadcast %148 : vector<8x1xf32> to vector<8x32xf32>
      %164 = arith.mulf %163, %162 : vector<8x32xf32>
      %165 = arith.truncf %151 : vector<8x8xf32> to vector<8x8xbf16>
      %cst_104 = arith.constant dense<0.000000e+00> : vector<8x32xf32>
      %166 = tpu.matmul %165, %138, %cst_104 {dimension_numbers = #tpu.dot_dimension_numbers<[1], [0], [0], [1], [0, 0, 1, 1], [], []>} : vector<8x8xbf16>, vector<8x32xbf16>, vector<8x32xf32> -> vector<8x32xf32>
      %167 = arith.addf %164, %166 : vector<8x32xf32>
      %c3_105 = arith.constant 3 : index
      %c0_106 = arith.constant 0 : index
      %c0_107 = arith.constant 0 : index
      %168 = vector.load %arg14[%c3_105, %c0_106, %c0_107] : memref<4x8x32xf32, #tpu.memory_space<vmem>>, vector<1x8x32xf32>
      %169 = vector.shape_cast %168 : vector<1x8x32xf32> to vector<8x32xf32>
      %170 = vector.shape_cast %167 : vector<8x32xf32> to vector<1x8x32xf32>
      tpu.vector_store %arg14[%c3_105, %c0_106, %c0_107], %170 {strides = array<i32>} : memref<4x8x32xf32, #tpu.memory_space<vmem>>, vector<1x8x32xf32>,
      %c3_108 = arith.constant 3 : index
      %c0_109 = arith.constant 0 : index
      %c0_110 = arith.constant 0 : index
      %171 = vector.load %arg12[%c3_108, %c0_109, %c0_110] : memref<4x8x1xf32, #tpu.memory_space<vmem>>, vector<1x8x1xf32>
      %172 = vector.shape_cast %171 : vector<1x8x1xf32> to vector<8x1xf32>
      %173 = vector.shape_cast %146 : vector<8x1xf32> to vector<1x8x1xf32>
      tpu.vector_store %arg12[%c3_108, %c0_109, %c0_110], %173 {strides = array<i32>} : memref<4x8x1xf32, #tpu.memory_space<vmem>>, vector<1x8x1xf32>,
    } else {
    }
    %c0_i32_2 = arith.constant 0 : i32
    %8 = arith.cmpi eq, %arg3, %c0_i32_2 : i32
    %9 = arith.extui %8 : i1 to i32
    %c0_i32_3 = arith.constant 0 : i32
    %10 = arith.cmpi ne, %9, %c0_i32_3 : i32
    scf.if %10 {
      %c0 = arith.constant 0 : index
      %c0_4 = arith.constant 0 : index
      %c0_5 = arith.constant 0 : index
      %11 = vector.load %arg13[%c0, %c0_4, %c0_5] : memref<4x8x1xf32, #tpu.memory_space<vmem>>, vector<1x8x1xf32>
      %12 = vector.shape_cast %11 : vector<1x8x1xf32> to vector<8x1xf32>
      %13 = tpu.reciprocal %12 {approx = true} : vector<8x1xf32> -> vector<8x1xf32>
      %c0_6 = arith.constant 0 : index
      %c0_7 = arith.constant 0 : index
      %c0_8 = arith.constant 0 : index
      %14 = vector.load %arg14[%c0_6, %c0_7, %c0_8] : memref<4x8x32xf32, #tpu.memory_space<vmem>>, vector<1x8x32xf32>
      %15 = vector.shape_cast %14 : vector<1x8x32xf32> to vector<8x32xf32>
      %16 = vector.broadcast %13 : vector<8x1xf32> to vector<8x32xf32>
      %17 = arith.mulf %15, %16 : vector<8x32xf32>
      %c1 = arith.constant 1 : index
      %c0_9 = arith.constant 0 : index
      %c0_10 = arith.constant 0 : index
      %18 = vector.load %arg13[%c1, %c0_9, %c0_10] : memref<4x8x1xf32, #tpu.memory_space<vmem>>, vector<1x8x1xf32>
      %19 = vector.shape_cast %18 : vector<1x8x1xf32> to vector<8x1xf32>
      %20 = tpu.reciprocal %19 {approx = true} : vector<8x1xf32> -> vector<8x1xf32>
      %c1_11 = arith.constant 1 : index
      %c0_12 = arith.constant 0 : index
      %c0_13 = arith.constant 0 : index
      %21 = vector.load %arg14[%c1_11, %c0_12, %c0_13] : memref<4x8x32xf32, #tpu.memory_space<vmem>>, vector<1x8x32xf32>
      %22 = vector.shape_cast %21 : vector<1x8x32xf32> to vector<8x32xf32>
      %23 = vector.broadcast %20 : vector<8x1xf32> to vector<8x32xf32>
      %24 = arith.mulf %22, %23 : vector<8x32xf32>
      %c2 = arith.constant 2 : index
      %c0_14 = arith.constant 0 : index
      %c0_15 = arith.constant 0 : index
      %25 = vector.load %arg13[%c2, %c0_14, %c0_15] : memref<4x8x1xf32, #tpu.memory_space<vmem>>, vector<1x8x1xf32>
      %26 = vector.shape_cast %25 : vector<1x8x1xf32> to vector<8x1xf32>
      %27 = tpu.reciprocal %26 {approx = true} : vector<8x1xf32> -> vector<8x1xf32>
      %c2_16 = arith.constant 2 : index
      %c0_17 = arith.constant 0 : index
      %c0_18 = arith.constant 0 : index
      %28 = vector.load %arg14[%c2_16, %c0_17, %c0_18] : memref<4x8x32xf32, #tpu.memory_space<vmem>>, vector<1x8x32xf32>
      %29 = vector.shape_cast %28 : vector<1x8x32xf32> to vector<8x32xf32>
      %30 = vector.broadcast %27 : vector<8x1xf32> to vector<8x32xf32>
      %31 = arith.mulf %29, %30 : vector<8x32xf32>
      %c3 = arith.constant 3 : index
      %c0_19 = arith.constant 0 : index
      %c0_20 = arith.constant 0 : index
      %32 = vector.load %arg13[%c3, %c0_19, %c0_20] : memref<4x8x1xf32, #tpu.memory_space<vmem>>, vector<1x8x1xf32>
      %33 = vector.shape_cast %32 : vector<1x8x1xf32> to vector<8x1xf32>
      %34 = tpu.reciprocal %33 {approx = true} : vector<8x1xf32> -> vector<8x1xf32>
      %c3_21 = arith.constant 3 : index
      %c0_22 = arith.constant 0 : index
      %c0_23 = arith.constant 0 : index
      %35 = vector.load %arg14[%c3_21, %c0_22, %c0_23] : memref<4x8x32xf32, #tpu.memory_space<vmem>>, vector<1x8x32xf32>
      %36 = vector.shape_cast %35 : vector<1x8x32xf32> to vector<8x32xf32>
      %37 = vector.broadcast %34 : vector<8x1xf32> to vector<8x32xf32>
      %38 = arith.mulf %36, %37 : vector<8x32xf32>
      %39 = tpu.concatenate %17, %24, %31, %38 in 1 : vector<8x32xf32>, vector<8x32xf32>, vector<8x32xf32>, vector<8x32xf32> -> vector<8x128xf32>
      %c0_24 = arith.constant 0 : index
      %c0_25 = arith.constant 0 : index
      %c0_26 = arith.constant 0 : index
      %40 = vector.load %arg10[%c0_24, %c0_25, %c0_26] : memref<1x8x128xf32, #tpu.memory_space<vmem>>, vector<1x8x128xf32>
      %41 = vector.shape_cast %40 : vector<1x8x128xf32> to vector<8x128xf32>
      %42 = vector.shape_cast %39 : vector<8x128xf32> to vector<1x8x128xf32>
      tpu.vector_store %arg10[%c0_24, %c0_25, %c0_26], %42 {strides = array<i32>} : memref<1x8x128xf32, #tpu.memory_space<vmem>>, vector<1x8x128xf32>,
    } else {
    }
    return
  }
  func.func @transform_0(%arg0: i32, %arg1: i32, %arg2: i32, %arg3: i32, %arg4: memref<1x1xi32, #tpu.memory_space<smem>>, %arg5: memref<1xi32, #tpu.memory_space<smem>>) -> (i32, i32, i32) {
    %c0_i32 = arith.constant 0 : i32
    return %arg1, %arg0, %arg2 : i32, i32, i32
  }
  func.func @transform_1(%arg0: i32, %arg1: i32, %arg2: i32, %arg3: i32, %arg4: memref<1x1xi32, #tpu.memory_space<smem>>, %arg5: memref<1xi32, #tpu.memory_space<smem>>) -> (i32, i32, i32) {
    %0 = arith.index_cast %arg0 : i32 to index
    %1 = arith.index_cast %arg3 : i32 to index
    %2 = memref.load %arg4[%0, %1] : memref<1x1xi32, #tpu.memory_space<smem>>
    %c0_i32 = arith.constant 0 : i32
    return %arg1, %2, %arg2 : i32, i32, i32
  }
  func.func @transform_2(%arg0: i32, %arg1: i32, %arg2: i32, %arg3: i32, %arg4: memref<1x1xi32, #tpu.memory_space<smem>>, %arg5: memref<1xi32, #tpu.memory_space<smem>>) -> (i32, i32, i32) {
    %0 = arith.index_cast %arg0 : i32 to index
    %1 = arith.index_cast %arg3 : i32 to index
    %2 = memref.load %arg4[%0, %1] : memref<1x1xi32, #tpu.memory_space<smem>>
    %c0_i32 = arith.constant 0 : i32
    return %arg1, %2, %arg2 : i32, i32, i32
  }
  func.func @transform_3(%arg0: i32, %arg1: i32, %arg2: i32, %arg3: i32, %arg4: memref<1x1xi32, #tpu.memory_space<smem>>, %arg5: memref<1xi32, #tpu.memory_space<smem>>) -> (i32, i32) {
    %0 = arith.index_cast %arg0 : i32 to index
    %1 = arith.index_cast %arg3 : i32 to index
    %2 = memref.load %arg4[%0, %1] : memref<1x1xi32, #tpu.memory_space<smem>>
    %c0_i32 = arith.constant 0 : i32
    return %arg0, %2 : i32, i32
  }
  func.func @transform_4(%arg0: i32, %arg1: i32, %arg2: i32, %arg3: i32, %arg4: memref<1x1xi32, #tpu.memory_space<smem>>, %arg5: memref<1xi32, #tpu.memory_space<smem>>) -> (i32, i32, i32) {
    %c0_i32 = arith.constant 0 : i32
    return %arg1, %arg0, %arg2 : i32, i32, i32
  }
}

</mosaic_0001>

<llo_original>
// kernel: tpu_custom_call.1
$region0: #{tpu_custom_call.1}
  #allocation0 [shape = 'u32[]', space=smem, size = 0x4, offset = 0x4, fixed_abs, tag = 'smem constant byte address 0x4 - core index']
  #allocation1 [shape = 'u32[144,128]{1,0:T(1,128)}', space=vmem, size = 0x12000, scoped, tag = 'internal scratch']
  #allocation2 [shape = 'bf16[4,8,32]{2,1,0:T(8,128)(2,1)}', space=vmem, size = 0x2000, scoped, tag = 'scratch operand']
  #allocation3 [shape = 'f32[4,8,1]{2,1,0:T(8,128)}', space=vmem, size = 0x4000, scoped, tag = 'scratch operand']
  #allocation4 [shape = 'f32[4,8,1]{2,1,0:T(8,128)}', space=vmem, size = 0x4000, scoped, tag = 'scratch operand']
  #allocation5 [shape = 'f32[4,8,32]{2,1,0:T(8,128)}', space=vmem, size = 0x4000, scoped, tag = 'scratch operand']
  #allocation6 [shape = 's32[1]{0}', space=sflag, size = 0x4, scoped, tag = 'scoped memory for tpu_custom_call.1']
  #allocation7 [shape = 's32[1,1]{1,0:T(1,128)S(6)}', space=smem, size = 0x200, scoped, tag = 'prefetched SMEM operand 0']
  #allocation8 [shape = 's32[1]{0:T(128)S(6)}', space=smem, size = 0x200, scoped, tag = 'prefetched SMEM operand 1']
  %s0 = inlined_call_operand.<no memory space> [shape: s32[1,1], index: 0, kind: input, shape index: {}]
  %s1 = inlined_call_operand.<no memory space> [shape: s32[1], index: 1, kind: input, shape index: {}]
  %s2 = inlined_call_operand.hbm [shape: f32[2,8,128], index: 2, kind: input, shape index: {}]
  %s3 = inlined_call_operand.hbm [shape: bf16[2,8,128], index: 3, kind: input, shape index: {}]
  %s4 = inlined_call_operand.hbm [shape: bf16[2,8,128], index: 4, kind: input, shape index: {}]
  %s5 = inlined_call_operand.vmem [shape: s8[8,8], index: 5, kind: input, shape index: {}]
  %s6 = inlined_call_operand.hbm [shape: f32[2,8,128], index: 6, kind: output, shape index: {}]
  %s7 = sld [smem:[#allocation0]]
  $region73: #{tpu_custom_call.1} parent=0
    _
  %s9 = ssub.s32 1, %s7
  %s10 = scalar_select 0, %s9, %s7
  %11 = sst [smem:[#allocation7]] %s0
  %12 = sst [smem:[#allocation8]] %s1
  $region1: #{tpu_custom_call.1} parent=0
    #allocation9 [shape = 'u8[8192]{0}', space=vmem, size = 0x2000, scoped, tag = 'input window, operand 2']
    #allocation10 [shape = 's32[2]{0}', space=sflag, size = 0x8, scoped, tag = 'scoped memory for tpu_custom_call.1']
    #allocation11 [shape = 's32[2]{0}', space=sflag, size = 0x8, scoped, tag = 'scoped memory for tpu_custom_call.1']
    #allocation12 [shape = 'u8[4096]{0}', space=vmem, size = 0x1000, scoped, tag = 'input window, operand 3']
    #allocation13 [shape = 's32[2]{0}', space=sflag, size = 0x8, scoped, tag = 'scoped memory for tpu_custom_call.1']
    #allocation14 [shape = 'u8[4096]{0}', space=vmem, size = 0x1000, scoped, tag = 'input window, operand 4']
    #allocation15 [shape = 'u8[8192]{0}', space=vmem, size = 0x2000, scoped, tag = 'output window, operand 0']
    %13 = vsyncpa [#allocation10], 0
    %s14 = scalar_lea.sflag [#allocation10], 1
    %15 = vsyncpa %s14, 0
    %16 = vsyncpa [#allocation13], 0
    %s17 = scalar_lea.sflag [#allocation13], 1
    %18 = vsyncpa %s17, 0
    %19 = vsyncpa [#allocation11], 0
    %s20 = scalar_lea.sflag [#allocation11], 1
    %21 = vsyncpa %s20, 0
    loop: start=0, step=1, limit=4
    $region2: #{tpu_custom_call.1} parent=1 // loop_pre_header
      _
    $region3: #{tpu_custom_call.1} parent=1 // loop_header
      %s23 = sphi 0, %s27
      %p24 = scmp.ge.s32.totalorder %s23, 4
      %s30 = sphi 0, %s56
      %s31 = sphi 0, %s52
      %s32 = sphi 0, %s48
      %s33 = sphi 0, %s44
      %s34 = sphi 0, %s30
      %s35 = sphi 0, %s31
      %s36 = sphi 0, %s32
      %s37 = sphi 0, %s33
      %s38 = sphi 0, %s34
      %s39 = sphi 0, %s35
      %s40 = sphi 0, %s36
      %s41 = sphi 0, %s37
      %s63 = sphi 0, %s65
      %s66 = sphi 0, %s63
      %s67 = sphi 0, %s66
      %s83 = sphi 0, %s67
      %s109 = sphi 0, %s111
      %s112 = sphi 0, %s109
      %s113 = sphi 0, %s112
      %s129 = sphi 0, %s113
      %s155 = sphi 0, %s157
      %s158 = sphi 0, %s155
      %s159 = sphi 0, %s158
      %s175 = sphi 0, %s159
      %s199 = sphi 0, %s201
      %s202 = sphi 0, %s199
      %s203 = sphi 0, %s202
      %s219 = sphi 0, %s203
      %s229 = sphi 0, %s231
      %s232 = sphi 0, %s229
      %s233 = sphi 0, %s232
      %s249 = sphi 0, %s233
    $region4: #{tpu_custom_call.1} parent=1 // loop_header_branch
      %26 = sbr.rel (%p24) target = $region8
    $region5: #{tpu_custom_call.1} parent=1 // loop_body
      %s28 = ssub.s32 %s23, 1
      %s29 = ssub.s32 %s23, 2
      %s42 = sadd.s32 1, %s33
      %p43 = scmp.ge.s32.totalorder %s42, 1
      %s44 = scalar_select %p43, 0, %s42
      %s45 = sadd.s32 1, %s32
      %s46 = scalar_select %p43, %s45, %s32
      %p47 = scmp.ge.s32.totalorder %s46, 1
      %s48 = scalar_select %p47, 0, %s46
      %s49 = sadd.s32 1, %s31
      %s50 = scalar_select %p47, %s49, %s31
      %p51 = scmp.ge.s32.totalorder %s50, 2
      %s52 = scalar_select %p51, 0, %s50
      %s53 = sadd.s32 1, %s30
      %s54 = scalar_select %p51, %s53, %s30
      %p55 = scmp.ge.s32.totalorder %s54, 1
      %s56 = scalar_select %p55, 0, %s54
      %s57 = ssub.s32 %s31, %s52
      %s58 = ssub.s32 %s30, %s56
      %s59 = sor.u32 %s57, %s58
      %s60 = ssub.s32 %s32, %s48
      %s61 = sor.u32 %s59, %s60
      %p62 = scmp.eq.s32.totalorder %s61, 0
      %s64 = sadd.s32 %s63, 1
      %s65 = scalar_select %p62, %s63, %s64
      %p68 = pneg %p62
      %p69 = scmp.eq.s32.totalorder %s23, 1
      %p70 = por %p68, %p69
      %p71 = scmp.ne.s32.totalorder %s63, %s66
      %p72 = scmp.eq.s32.totalorder %s23, 0
      %p73 = por %p71, %p72
      %p74 = scmp.ne.s32.totalorder %s63, %s66
      %p75 = scmp.eq.s32.totalorder %s28, 1
      %p76 = por %p74, %p75
      %p77 = scmp.ne.s32.totalorder %s66, %s67
      %p78 = scmp.eq.s32.totalorder %s28, 0
      %p79 = por %p77, %p78
      %p80 = scmp.ne.s32.totalorder %s66, %s67
      %p81 = scmp.eq.s32.totalorder %s29, 1
      %p82 = por %p80, %p81
      %p84 = scmp.ne.s32.totalorder %s67, %s83
      %p85 = scmp.eq.s32.totalorder %s29, 0
      %p86 = por %p84, %p85
      %s87 = sshra.s32 %s33, 7
      %s88 = sand.u32 %s33, 127
      %s89 = sadd.s32 %s87, %s30
      %s90 = smul.u32 %s89, 128
      %s91 = sshra.s32 %s33, 7
      %s92 = sand.u32 %s33, 127
      %s93 = sadd.s32 %s90, %s92
      %s94 = sld [smem:[#allocation7 + %s93]]
      %s95 = sshra.s32 %s44, 7
      %s96 = sand.u32 %s44, 127
      %s97 = sadd.s32 %s95, %s56
      %s98 = smul.u32 %s97, 128
      %s99 = sshra.s32 %s44, 7
      %s100 = sand.u32 %s44, 127
      %s101 = sadd.s32 %s98, %s100
      %s102 = sld [smem:[#allocation7 + %s101]]
      %s103 = ssub.s32 %s31, %s52
      %s104 = ssub.s32 %s94, %s102
      %s105 = sor.u32 %s103, %s104
      %s106 = ssub.s32 %s32, %s48
      %s107 = sor.u32 %s105, %s106
      %p108 = scmp.eq.s32.totalorder %s107, 0
      %s110 = sadd.s32 %s109, 1
      %s111 = scalar_select %p108, %s109, %s110
      %p114 = pneg %p108
      %p115 = scmp.eq.s32.totalorder %s23, 1
      %p116 = por %p114, %p115
      %p117 = scmp.ne.s32.totalorder %s109, %s112
      %p118 = scmp.eq.s32.totalorder %s23, 0
      %p119 = por %p117, %p118
      %p120 = scmp.ne.s32.totalorder %s109, %s112
      %p121 = scmp.eq.s32.totalorder %s28, 1
      %p122 = por %p120, %p121
      %p123 = scmp.ne.s32.totalorder %s112, %s113
      %p124 = scmp.eq.s32.totalorder %s28, 0
      %p125 = por %p123, %p124
      %p126 = scmp.ne.s32.totalorder %s112, %s113
      %p127 = scmp.eq.s32.totalorder %s29, 1
      %p128 = por %p126, %p127
      %p130 = scmp.ne.s32.totalorder %s113, %s129
      %p131 = scmp.eq.s32.totalorder %s29, 0
      %p132 = por %p130, %p131
      %s133 = sshra.s32 %s33, 7
      %s134 = sand.u32 %s33, 127
      %s135 = sadd.s32 %s133, %s30
      %s136 = smul.u32 %s135, 128
      %s137 = sshra.s32 %s33, 7
      %s138 = sand.u32 %s33, 127
      %s139 = sadd.s32 %s136, %s138
      %s140 = sld [smem:[#allocation7 + %s139]]
      %s141 = sshra.s32 %s44, 7
      %s142 = sand.u32 %s44, 127
      %s143 = sadd.s32 %s141, %s56
      %s144 = smul.u32 %s143, 128
      %s145 = sshra.s32 %s44, 7
      %s146 = sand.u32 %s44, 127
      %s147 = sadd.s32 %s144, %s146
      %s148 = sld [smem:[#allocation7 + %s147]]
      %s149 = ssub.s32 %s31, %s52
      %s150 = ssub.s32 %s140, %s148
      %s151 = sor.u32 %s149, %s150
      %s152 = ssub.s32 %s32, %s48
      %s153 = sor.u32 %s151, %s152
      %p154 = scmp.eq.s32.totalorder %s153, 0
      %s156 = sadd.s32 %s155, 1
      %s157 = scalar_select %p154, %s155, %s156
      %p160 = pneg %p154
      %p161 = scmp.eq.s32.totalorder %s23, 1
      %p162 = por %p160, %p161
      %p163 = scmp.ne.s32.totalorder %s155, %s158
      %p164 = scmp.eq.s32.totalorder %s23, 0
      %p165 = por %p163, %p164
      %p166 = scmp.ne.s32.totalorder %s155, %s158
      %p167 = scmp.eq.s32.totalorder %s28, 1
      %p168 = por %p166, %p167
      %p169 = scmp.ne.s32.totalorder %s158, %s159
      %p170 = scmp.eq.s32.totalorder %s28, 0
      %p171 = por %p169, %p170
      %p172 = scmp.ne.s32.totalorder %s158, %s159
      %p173 = scmp.eq.s32.totalorder %s29, 1
      %p174 = por %p172, %p173
      %p176 = scmp.ne.s32.totalorder %s159, %s175
      %p177 = scmp.eq.s32.totalorder %s29, 0
      %p178 = por %p176, %p177
      %s179 = sshra.s32 %s33, 7
      %s180 = sand.u32 %s33, 127
      %s181 = sadd.s32 %s179, %s30
      %s182 = smul.u32 %s181, 128
      %s183 = sshra.s32 %s33, 7
      %s184 = sand.u32 %s33, 127
      %s185 = sadd.s32 %s182, %s184
      %s186 = sld [smem:[#allocation7 + %s185]]
      %s187 = sshra.s32 %s44, 7
      %s188 = sand.u32 %s44, 127
      %s189 = sadd.s32 %s187, %s56
      %s190 = smul.u32 %s189, 128
      %s191 = sshra.s32 %s44, 7
      %s192 = sand.u32 %s44, 127
      %s193 = sadd.s32 %s190, %s192
      %s194 = sld [smem:[#allocation7 + %s193]]
      %s195 = ssub.s32 %s30, %s56
      %s196 = ssub.s32 %s186, %s194
      %s197 = sor.u32 %s195, %s196
      %p198 = scmp.eq.s32.totalorder %s197, 0
      %s200 = sadd.s32 %s199, 1
      %s201 = scalar_select %p198, %s199, %s200
      %p204 = pneg %p198
      %p205 = scmp.eq.s32.totalorder %s23, 1
      %p206 = por %p204, %p205
      %p207 = scmp.ne.s32.totalorder %s199, %s202
      %p208 = scmp.eq.s32.totalorder %s23, 0
      %p209 = por %p207, %p208
      %p210 = scmp.ne.s32.totalorder %s199, %s202
      %p211 = scmp.eq.s32.totalorder %s28, 1
      %p212 = por %p210, %p211
      %p213 = scmp.ne.s32.totalorder %s202, %s203
      %p214 = scmp.eq.s32.totalorder %s28, 0
      %p215 = por %p213, %p214
      %p216 = scmp.ne.s32.totalorder %s202, %s203
      %p217 = scmp.eq.s32.totalorder %s29, 1
      %p218 = por %p216, %p217
      %p220 = scmp.ne.s32.totalorder %s203, %s219
      %p221 = scmp.eq.s32.totalorder %s29, 0
      %p222 = por %p220, %p221
      %s223 = ssub.s32 %s31, %s52
      %s224 = ssub.s32 %s30, %s56
      %s225 = sor.u32 %s223, %s224
      %s226 = ssub.s32 %s32, %s48
      %s227 = sor.u32 %s225, %s226
      %p228 = scmp.eq.s32.totalorder %s227, 0
      %s230 = sadd.s32 %s229, 1
      %s231 = scalar_select %p228, %s229, %s230
      %p234 = pneg %p228
      %p235 = scmp.eq.s32.totalorder %s23, 1
      %p236 = por %p234, %p235
      %p237 = scmp.ne.s32.totalorder %s229, %s232
      %p238 = scmp.eq.s32.totalorder %s23, 0
      %p239 = por %p237, %p238
      %p240 = scmp.ne.s32.totalorder %s229, %s232
      %p241 = scmp.eq.s32.totalorder %s28, 1
      %p242 = por %p240, %p241
      %p243 = scmp.ne.s32.totalorder %s232, %s233
      %p244 = scmp.eq.s32.totalorder %s28, 0
      %p245 = por %p243, %p244
      %p246 = scmp.ne.s32.totalorder %s232, %s233
      %p247 = scmp.eq.s32.totalorder %s29, 1
      %p248 = por %p246, %p247
      %p250 = scmp.ne.s32.totalorder %s233, %s249
      %p251 = scmp.eq.s32.totalorder %s29, 0
      %p252 = por %p250, %p251
      %p253 = scmp.le.s32.totalorder 1, %s23
      %p254 = scmp.lt.s32.totalorder %s23, 3
      %p255 = pnand %p253, %p254
      %p256 = pneg %p255
      // Predicated region
      $region9: #{tpu_custom_call.1} parent=5 // pred_check
        _
      $region10: #{tpu_custom_call.1} parent=5 // pred_check_branch
        %258 = sbr.rel (%p255) target = $region12
      $region11: #{tpu_custom_call.1} parent=5 // pred_region
        %s259 = ssub.s32 %s23, 1
        // Predicated region
        $region13: #{tpu_custom_call.1} parent=11 // pred_check
          %p260 = pneg %p215
        $region14: #{tpu_custom_call.1} parent=11 // pred_check_branch
          %262 = sbr.rel (%p260) target = $region16
        $region15: #{tpu_custom_call.1} parent=11 // pred_region
          %s263 = sshra.s32 %s37, 7
          %s264 = sand.u32 %s37, 127
          %s265 = sadd.s32 %s263, %s34
          %s266 = smul.u32 %s265, 128
          %s267 = sshra.s32 %s37, 7
          %s268 = sand.u32 %s37, 127
          %s269 = sadd.s32 %s266, %s268
          %s270 = sld [smem:[#allocation7 + %s269]]
          %p271 = scmp.lt.s32.totalorder %s34, 0
          %s272 = scalar_select %p271, %s34, 0
          %p273 = scmp.lt.s32.totalorder %s270, 0
          %s274 = scalar_select %p273, %s270, 0
          %s275 = sadd.s32 %s274, %s272
          %s276 = smul.addr %s275, 2
          %s277 = scalar_lea.vmem %s5, %s276
          %s278 = sshra.s32 %s37, 7
          %s279 = sand.u32 %s37, 127
          %s280 = sadd.s32 %s278, %s34
          %s281 = smul.u32 %s280, 128
          %s282 = sshra.s32 %s37, 7
          %s283 = sand.u32 %s37, 127
          %s284 = sadd.s32 %s281, %s283
          %s285 = sld [smem:[#allocation7 + %s284]]
        $region16: #{tpu_custom_call.1} parent=11 // pred_fallthru
          _
      $region12: #{tpu_custom_call.1} parent=5 // pred_fallthru
        _
      %p286 = scmp.lt.s32.totalorder %s23, 2
      // Predicated region
      $region17: #{tpu_custom_call.1} parent=5 // pred_check
        %p287 = pneg %p286
      $region18: #{tpu_custom_call.1} parent=5 // pred_check_branch
        %289 = sbr.rel (%p287) target = $region20
      $region19: #{tpu_custom_call.1} parent=5 // pred_region
        // Predicated region
        $region21: #{tpu_custom_call.1} parent=19 // pred_check
          %p290 = pneg %p73
        $region22: #{tpu_custom_call.1} parent=19 // pred_check_branch
          %292 = sbr.rel (%p290) target = $region24
        $region23: #{tpu_custom_call.1} parent=19 // pred_region
          %s293 = sand.u32 %s63, 1
          %s294 = scalar_lea.sflag [#allocation10], %s293
          %s295 = sand.u32 %s63, 1
          %s296 = smul.addr %s295, 8
          %s297 = scalar_lea.vmem [#allocation9], %s296
          %s299 = ssub.s32 128, 128
          %300 = vsyncadd %s294, %s299
          %s301 = sadd.s32 %s32, %s30
          %s302 = sadd.s32 %s301, %s31
          %s303 = smul.addr %s302, 128
          %s304 = scalar_lea.hbm %s2, %s303
          %s306 = sshll.u32 %s297, 4
          %s307 = int_to_ptr.vmem [resolvable:$true] %s306
          %309 = dma.hbm_to_vmem [thread:$0]  %s304, 128, %s307, %s294
        $region24: #{tpu_custom_call.1} parent=19 // pred_fallthru
          _
        // Predicated region
        $region25: #{tpu_custom_call.1} parent=19 // pred_check
          %p310 = pneg %p119
        $region26: #{tpu_custom_call.1} parent=19 // pred_check_branch
          %312 = sbr.rel (%p310) target = $region28
        $region27: #{tpu_custom_call.1} parent=19 // pred_region
          %s313 = sand.u32 %s23, 1
          %s314 = scalar_lea.sflag [#allocation13], %s313
          %s315 = sand.u32 %s109, 1
          %s316 = smul.addr %s315, 4
          %s317 = scalar_lea.vmem [#allocation12], %s316
          %s318 = sshra.s32 %s33, 7
          %s319 = sand.u32 %s33, 127
          %s320 = sadd.s32 %s318, %s30
          %s321 = smul.u32 %s320, 128
          %s322 = sshra.s32 %s33, 7
          %s323 = sand.u32 %s33, 127
          %s324 = sadd.s32 %s321, %s323
          %s325 = sld [smem:[#allocation7 + %s324]]
          %s327 = ssub.s32 64, 64
          %328 = vsyncadd %s314, %s327
          %s329 = sadd.s32 %s32, %s325
          %s330 = sadd.s32 %s329, %s31
          %s331 = smul.addr %s330, 64
          %s332 = scalar_lea.hbm %s3, %s331
          %s334 = sshll.u32 %s317, 4
          %s335 = int_to_ptr.vmem [resolvable:$true] %s334
          %337 = dma.hbm_to_vmem [thread:$0]  %s332, 64, %s335, %s314
        $region28: #{tpu_custom_call.1} parent=19 // pred_fallthru
          _
        // Predicated region
        $region29: #{tpu_custom_call.1} parent=19 // pred_check
          %p338 = pneg %p165
        $region30: #{tpu_custom_call.1} parent=19 // pred_check_branch
          %340 = sbr.rel (%p338) target = $region32
        $region31: #{tpu_custom_call.1} parent=19 // pred_region
          %s341 = sand.u32 %s23, 1
          %s342 = scalar_lea.sflag [#allocation13], %s341
          %s343 = sand.u32 %s155, 1
          %s344 = smul.addr %s343, 4
          %s345 = scalar_lea.vmem [#allocation14], %s344
          %s346 = sshra.s32 %s33, 7
          %s347 = sand.u32 %s33, 127
          %s348 = sadd.s32 %s346, %s30
          %s349 = smul.u32 %s348, 128
          %s350 = sshra.s32 %s33, 7
          %s351 = sand.u32 %s33, 127
          %s352 = sadd.s32 %s349, %s351
          %s353 = sld [smem:[#allocation7 + %s352]]
          %s355 = ssub.s32 64, 64
          %356 = vsyncadd %s342, %s355
          %s357 = sadd.s32 %s32, %s353
          %s358 = sadd.s32 %s357, %s31
          %s359 = smul.addr %s358, 64
          %s360 = scalar_lea.hbm %s4, %s359
          %s362 = sshll.u32 %s345, 4
          %s363 = int_to_ptr.vmem [resolvable:$true] %s362
          %365 = dma.hbm_to_vmem [thread:$0]  %s360, 64, %s363, %s342
        $region32: #{tpu_custom_call.1} parent=19 // pred_fallthru
          _
      $region20: #{tpu_custom_call.1} parent=5 // pred_fallthru
        _
      %p366 = scmp.le.s32.totalorder 1, %s23
      %p367 = scmp.lt.s32.totalorder %s23, 3
      %p368 = pnand %p366, %p367
      %p369 = pneg %p368
      // Predicated region
      $region33: #{tpu_custom_call.1} parent=5 // pred_check
        _
      $region34: #{tpu_custom_call.1} parent=5 // pred_check_branch
        %371 = sbr.rel (%p368) target = $region36
      $region35: #{tpu_custom_call.1} parent=5 // pred_region
        %s372 = ssub.s32 %s23, 1
        %s373 = sand.u32 %s66, 1
        %s374 = scalar_lea.sflag [#allocation10], %s373
        %s375 = sand.u32 %s66, 1
        %s376 = smul.addr %s375, 8
        %s377 = scalar_lea.vmem [#allocation9], %s376
        // Predicated region
        $region37: #{tpu_custom_call.1} parent=35 // pred_check
          %p378 = pneg %p79
        $region38: #{tpu_custom_call.1} parent=35 // pred_check_branch
          %380 = sbr.rel (%p378) target = $region40
        $region39: #{tpu_custom_call.1} parent=35 // pred_region
          %381 = dma.done %s374, 128
        $region40: #{tpu_custom_call.1} parent=35 // pred_fallthru
          _
        %s382 = sand.u32 %s28, 1
        %s383 = scalar_lea.sflag [#allocation13], %s382
        %s384 = sand.u32 %s112, 1
        %s385 = smul.addr %s384, 4
        %s386 = scalar_lea.vmem [#allocation12], %s385
        // Predicated region
        $region41: #{tpu_custom_call.1} parent=35 // pred_check
          %p387 = pneg %p125
        $region42: #{tpu_custom_call.1} parent=35 // pred_check_branch
          %389 = sbr.rel (%p387) target = $region44
        $region43: #{tpu_custom_call.1} parent=35 // pred_region
          %390 = dma.done %s383, 64
        $region44: #{tpu_custom_call.1} parent=35 // pred_fallthru
          _
        %s391 = sand.u32 %s28, 1
        %s392 = scalar_lea.sflag [#allocation13], %s391
        %s393 = sand.u32 %s158, 1
        %s394 = smul.addr %s393, 4
        %s395 = scalar_lea.vmem [#allocation14], %s394
        // Predicated region
        $region45: #{tpu_custom_call.1} parent=35 // pred_check
          %p396 = pneg %p171
        $region46: #{tpu_custom_call.1} parent=35 // pred_check_branch
          %398 = sbr.rel (%p396) target = $region48
        $region47: #{tpu_custom_call.1} parent=35 // pred_region
          %399 = dma.done %s392, 64
        $region48: #{tpu_custom_call.1} parent=35 // pred_fallthru
          _
        %s400 = sand.u32 %s66, 1
        %s401 = scalar_lea.sflag [#allocation10], %s400
        %s402 = sand.u32 %s66, 1
        %s403 = smul.addr %s402, 8
        %s404 = scalar_lea.vmem [#allocation9], %s403
        %p405 = pneg %p79
        %p406 = pneg %p76
        %s407 = sand.u32 %s28, 1
        %s408 = scalar_lea.sflag [#allocation13], %s407
        %s409 = sand.u32 %s112, 1
        %s410 = smul.addr %s409, 4
        %s411 = scalar_lea.vmem [#allocation12], %s410
        %p412 = pneg %p125
        %p413 = pneg %p122
        %s414 = sand.u32 %s28, 1
        %s415 = scalar_lea.sflag [#allocation13], %s414
        %s416 = sand.u32 %s158, 1
        %s417 = smul.addr %s416, 4
        %s418 = scalar_lea.vmem [#allocation14], %s417
        %p419 = pneg %p171
        %p420 = pneg %p168
        %s421 = sshra.s32 %s37, 7
        %s422 = sand.u32 %s37, 127
        %s423 = sadd.s32 %s421, %s34
        %s424 = smul.u32 %s423, 128
        %s425 = sshra.s32 %s37, 7
        %s426 = sand.u32 %s37, 127
        %s427 = sadd.s32 %s424, %s426
        %s428 = sld [smem:[#allocation7 + %s427]]
        %p429 = scmp.lt.s32.totalorder %s34, 0
        %s430 = scalar_select %p429, %s34, 0
        %p431 = scmp.lt.s32.totalorder %s428, 0
        %s432 = scalar_select %p431, %s428, 0
        %s433 = sadd.s32 %s432, %s430
        %s434 = smul.addr %s433, 2
        %s435 = scalar_lea.vmem %s5, %s434
        %p436 = pneg %p215
        %p437 = pneg %p212
        %p438 = pneg %p245
        %p439 = pneg %p242
        %s440 = sand.u32 %s232, 1
        %s441 = scalar_lea.sflag [#allocation11], %s440
        %s442 = sand.u32 %s232, 1
        %s443 = smul.addr %s442, 8
        %s444 = scalar_lea.vmem [#allocation15], %s443
        %s445 = sshra.s32 %s37, 7
        %s446 = sand.u32 %s37, 127
        %s447 = sadd.s32 %s445, %s34
        %s448 = smul.u32 %s447, 128
        %s449 = sshra.s32 %s37, 7
        %s450 = sand.u32 %s37, 127
        %s451 = sadd.s32 %s448, %s450
        %s452 = sld [smem:[#allocation7 + %s451]]
        %s453 = sshra.s32 %s37, 7
        %s454 = sand.u32 %s37, 127
        %s455 = sadd.s32 %s453, %s34
        %s456 = smul.u32 %s455, 128
        %s457 = sshra.s32 %s37, 7
        %s458 = sand.u32 %s37, 127
        %s459 = sadd.s32 %s456, %s458
        %s460 = sld [smem:[#allocation7 + %s459]]
        %s461 = sshra.s32 %s37, 7
        %s462 = sand.u32 %s37, 127
        %s463 = sadd.s32 %s461, %s34
        %s464 = smul.u32 %s463, 128
        %s465 = sshra.s32 %s37, 7
        %s466 = sand.u32 %s37, 127
        %s467 = sadd.s32 %s464, %s466
        %s468 = sld [smem:[#allocation7 + %s467]]
        %p469 = scmp.lt.s32.totalorder %s34, 0
        %s470 = scalar_select %p469, %s34, 0
        %p471 = scmp.lt.s32.totalorder %s468, 0
        %s472 = scalar_select %p471, %s468, 0
        %s473 = sadd.s32 %s472, %s470
        %s474 = smul.addr %s473, 2
        %s475 = scalar_lea.vmem %s5, %s474
        %s476 = sshra.s32 %s37, 7
        %s477 = sand.u32 %s37, 127
        %s478 = sadd.s32 %s476, %s34
        %s479 = smul.u32 %s478, 128
        %s480 = sshra.s32 %s37, 7
        %s481 = sand.u32 %s37, 127
        %s482 = sadd.s32 %s479, %s481
        %s483 = sld [smem:[#allocation7 + %s482]]
        %p487 = scmp.eq.s32.totalorder %s37, 0
        // Predicated region
        $region49: #{tpu_custom_call.1} parent=35 // pred_check
          %p488 = pneg %p487
        $region50: #{tpu_custom_call.1} parent=35 // pred_check_branch
          %490 = sbr.rel (%p488) target = $region52
        $region51: #{tpu_custom_call.1} parent=35 // pred_region
          %v491 = vld [vmem:[%s377] sm:$0xff]
          %v492 = vmul.f32 %v491, 0.17677669
          %v493 = vpack.c.bf16 %v492, %v492
          %vm494 = vcmask 257024
          %495 = vst.msk [vmem:[#allocation2] sm:$0xf] %vm494, %v493
          %v497 = vunpack.c.l.b16 %v493
          %v498 = vpack.c.b16 %v497, %v497
          %499 = vrot.lane.b32.xlu0 %v498, 96
          %v500 = vpop.permute.xlu0 %499
          %s502 = scalar_lea.vmem [#allocation2], 4
          %503 = vst.msk [vmem:[%s502] sm:$0xf] %vm494, %v500
          %504 = vrot.lane.b32.xlu0 %v498, 64
          %v505 = vpop.permute.xlu0 %504
          %s507 = scalar_lea.vmem [#allocation2], 8
          %508 = vst.msk [vmem:[%s507] sm:$0xf] %vm494, %v505
          %509 = vrot.lane.b32.xlu0 %v498, 32
          %v510 = vpop.permute.xlu0 %509
          %s512 = scalar_lea.vmem [#allocation2], 12
          %513 = vst.msk [vmem:[%s512] sm:$0xf] %vm494, %v510
          %vm514 = vcmask 7168
          %515 = vst.msk [vmem:[#allocation3] sm:$0xff] %vm514, -inf
          %516 = vst.msk [vmem:[#allocation3 + $0x8] sm:$0xff] %vm514, -inf
          %517 = vst.msk [vmem:[#allocation3 + $0x10] sm:$0xff] %vm514, -inf
          %518 = vst.msk [vmem:[#allocation3 + $0x18] sm:$0xff] %vm514, -inf
          %519 = vst.msk [vmem:[#allocation4] sm:$0xff] %vm514, 0.0
          %520 = vst.msk [vmem:[#allocation4 + $0x8] sm:$0xff] %vm514, 0.0
          %521 = vst.msk [vmem:[#allocation4 + $0x10] sm:$0xff] %vm514, 0.0
          %522 = vst.msk [vmem:[#allocation4 + $0x18] sm:$0xff] %vm514, 0.0
          %vm523 = vcmask 261120
          %524 = vst.msk [vmem:[#allocation5] sm:$0xff] %vm523, 0.0
          %525 = vst.msk [vmem:[#allocation5 + $0x8] sm:$0xff] %vm523, 0.0
          %526 = vst.msk [vmem:[#allocation5 + $0x10] sm:$0xff] %vm523, 0.0
          %527 = vst.msk [vmem:[#allocation5 + $0x18] sm:$0xff] %vm523, 0.0
        $region52: #{tpu_custom_call.1} parent=35 // pred_fallthru
          _
        %s528 = sld [smem:[#allocation8 + %s34]]
        %p529 = scmp.lt.s32.totalorder %s37, %s528
        // Predicated region
        $region53: #{tpu_custom_call.1} parent=35 // pred_check
          %p530 = pneg %p529
        $region54: #{tpu_custom_call.1} parent=35 // pred_check_branch
          %532 = sbr.rel (%p530) target = $region56
        $region55: #{tpu_custom_call.1} parent=35 // pred_region
          %v533 = vld [vmem:[%s475] sm:$0x3]
          %vm534 = vnez %v533
          %v535 = vld [vmem:[%s386] sm:$0xf]
          %v536 = vld [vmem:[%s395] sm:$0xf]
          %v537 = vld [vmem:[#allocation2] sm:$0xf]
          %vm538 = vcmask 261120
          %v540 = vsel %vm538, %v537, 0
          %v543 = vsel %vm538, %v535, 0
          %545 = vmatprep.subr.bf16.mxu0 0
          %546 = vmatpush1.bf16.xpose.msra.mxu0 0
          %547 = vmatprep.subr.bf16.mxu0 0
          %548 = vmatpush1.bf16.xpose.msra.mxu0 0
          %549 = vmatprep.subr.bf16.mxu0 0
          %550 = vmatpush1.bf16.xpose.msra.mxu0 0
          %551 = vmatprep.subr.bf16.mxu0 0
          %552 = vmatpush1.bf16.xpose.msra.mxu0 0
          %553 = vmatprep.subr.bf16.mxu0 0
          %554 = vmatpush1.bf16.xpose.msra.mxu0 0
          %555 = vmatprep.subr.bf16.mxu0 0
          %556 = vmatpush1.bf16.xpose.msra.mxu0 0
          %557 = vmatprep.subr.bf16.mxu0 0
          %558 = vmatpush1.bf16.xpose.msra.mxu0 0
          %559 = vmatprep.subr.bf16.mxu0 0
          %560 = vmatpush1.bf16.xpose.msra.mxu0 %v543
          %561 = vmatprep.subr.bf16.mxu0 0
          %562 = vmatpush2.bf16.xpose.msra.mxu0 0
          %563 = vmatprep.subr.bf16.mxu0 0
          %564 = vmatpush2.bf16.xpose.msra.mxu0 0
          %565 = vmatprep.subr.bf16.mxu0 0
          %566 = vmatpush2.bf16.xpose.msra.mxu0 0
          %567 = vmatprep.subr.bf16.mxu0 0
          %568 = vmatpush2.bf16.xpose.msra.mxu0 0
          %569 = vmatprep.subr.bf16.mxu0 0
          %570 = vmatpush2.bf16.xpose.msra.mxu0 0
          %571 = vmatprep.subr.bf16.mxu0 0
          %572 = vmatpush2.bf16.xpose.msra.mxu0 0
          %573 = vmatprep.subr.bf16.mxu0 0
          %574 = vmatpush2.bf16.xpose.msra.mxu0 0
          %575 = vmatprep.subr.bf16.mxu0 0
          %576 = vmatpush2.bf16.xpose.msra.mxu0 0
          %577 = vmatprep.mubr.bf16.mxu0 0
          %578 = vmatmul.mubr.bf16.gmra.mxu0 %v540
          %v579 = vpop.f32.mrf.mxu0
          %v580 = vadd.f32 0.0, %v579
          %v581 = vpop.f32.mrf.mxu0
          %v582 = vpop.f32.mrf.mxu0
          %v583 = vpop.f32.mrf.mxu0
          %584 = vdwg.mxu0
          %v585 = vsel %vm534, 16843009, 0
          %v586 = vunpack.c.0.s8 %v585
          %vm587 = vcmp.ne.s32.totalorder %v586, 0
          %v588 = vsel %vm587, %v580, -1.7677669e+08
          %v589 = vld [vmem:[#allocation3] sm:$0xff]
          %vm590 = vcmask 64512
          %v591 = vsel %vm590, %v588, -inf
          %592 = vmax.xlane.f32.xlu0 %v591
          %v593 = vpop.xlane.xlu0 %592
          %v594 = vmax.f32 %v589, %v593
          %v595 = vsub.f32 %v589, %v594
          %v596 = vmul.f32 %v595, 1.442695
          %v597 = vpow.pop %v596
          %599 = vset.pattern.permute.xlu0 0
          %600 = vperm.xlu0 %599, %v594
          %v601 = vpop.permute.xlu0 %600
          %v603 = vsub.f32 %v588, %v601
          %v604 = vmul.f32 %v603, 1.442695
          %v605 = vpow.pop %v604
          %v606 = vld [vmem:[#allocation4] sm:$0xff]
          %v607 = vmul.f32 %v597, %v606
          %v608 = vsel %vm590, %v605, 0.0
          %609 = vadd.xlane.f32.xlu0 %v608
          %v610 = vpop.xlane.xlu0 %609
          %v611 = vadd.f32 %v607, %v610
          %vm612 = vcmask 7168
          %613 = vst.msk [vmem:[#allocation4] sm:$0xff] %vm612, %v611
          %v614 = vld [vmem:[#allocation5] sm:$0xff]
          %616 = vset.pattern.permute.xlu0 0
          %617 = vperm.xlu0 %616, %v597
          %v618 = vpop.permute.xlu0 %617
          %v620 = vmul.f32 %v618, %v614
          %v621 = vpack.c.bf16 %v605, %v605
          %v623 = vsel %vm590, %v621, 0
          %vm625 = vcmask 1043456
          %v627 = vsel %vm625, %v536, 0
          %629 = vmatprep.subr.bf16.mxu0 0
          %630 = vmatpush1.bf16.msra.mxu0 0
          %631 = vmatprep.subr.bf16.mxu0 0
          %632 = vmatpush1.bf16.msra.mxu0 0
          %633 = vmatprep.subr.bf16.mxu0 0
          %634 = vmatpush1.bf16.msra.mxu0 0
          %635 = vmatprep.subr.bf16.mxu0 0
          %636 = vmatpush1.bf16.msra.mxu0 0
          %637 = vmatprep.subr.bf16.mxu0 0
          %638 = vmatpush1.bf16.msra.mxu0 0
          %639 = vmatprep.subr.bf16.mxu0 0
          %640 = vmatpush1.bf16.msra.mxu0 0
          %641 = vmatprep.subr.bf16.mxu0 0
          %642 = vmatpush1.bf16.msra.mxu0 0
          %643 = vmatprep.subr.bf16.mxu0 0
          %644 = vmatpush1.bf16.msra.mxu0 %v627
          %645 = vmatprep.subr.bf16.mxu0 0
          %646 = vmatpush2.bf16.msra.mxu0 0
          %647 = vmatprep.subr.bf16.mxu0 0
          %648 = vmatpush2.bf16.msra.mxu0 0
          %649 = vmatprep.subr.bf16.mxu0 0
          %650 = vmatpush2.bf16.msra.mxu0 0
          %651 = vmatprep.subr.bf16.mxu0 0
          %652 = vmatpush2.bf16.msra.mxu0 0
          %653 = vmatprep.subr.bf16.mxu0 0
          %654 = vmatpush2.bf16.msra.mxu0 0
          %655 = vmatprep.subr.bf16.mxu0 0
          %656 = vmatpush2.bf16.msra.mxu0 0
          %657 = vmatprep.subr.bf16.mxu0 0
          %658 = vmatpush2.bf16.msra.mxu0 0
          %659 = vmatprep.subr.bf16.mxu0 0
          %660 = vmatpush2.bf16.msra.mxu0 0
          %661 = vmatprep.mubr.bf16.mxu0 0
          %662 = vmatmul.mubr.bf16.gmra.mxu0 %v623
          %v663 = vpop.f32.mrf.mxu0
          %v664 = vadd.f32 0.0, %v663
          %v665 = vpop.f32.mrf.mxu0
          %v666 = vpop.f32.mrf.mxu0
          %v667 = vpop.f32.mrf.mxu0
          %668 = vdwg.mxu0
          %v669 = vadd.f32 %v620, %v664
          %670 = vst.msk [vmem:[#allocation5] sm:$0xff] %vm538, %v669
          %671 = vst.msk [vmem:[#allocation3] sm:$0xff] %vm612, %v594
          %s672 = scalar_lea.vmem [#allocation2], 4
          %v673 = vld [vmem:[%s672] sm:$0xf]
          %v675 = vunpack.c.l.b16 %v535
          %v676 = vpack.c.b16 %v675, %v675
          %677 = vrot.lane.b32.xlu0 %v676, 96
          %v678 = vpop.permute.xlu0 %677
          %v680 = vsel %vm538, %v673, 0
          %v683 = vsel %vm538, %v678, 0
          %685 = vmatprep.subr.bf16.mxu0 0
          %686 = vmatpush1.bf16.xpose.msra.mxu0 0
          %687 = vmatprep.subr.bf16.mxu0 0
          %688 = vmatpush1.bf16.xpose.msra.mxu0 0
          %689 = vmatprep.subr.bf16.mxu0 0
          %690 = vmatpush1.bf16.xpose.msra.mxu0 0
          %691 = vmatprep.subr.bf16.mxu0 0
          %692 = vmatpush1.bf16.xpose.msra.mxu0 0
          %693 = vmatprep.subr.bf16.mxu0 0
          %694 = vmatpush1.bf16.xpose.msra.mxu0 0
          %695 = vmatprep.subr.bf16.mxu0 0
          %696 = vmatpush1.bf16.xpose.msra.mxu0 0
          %697 = vmatprep.subr.bf16.mxu0 0
          %698 = vmatpush1.bf16.xpose.msra.mxu0 0
          %699 = vmatprep.subr.bf16.mxu0 0
          %700 = vmatpush1.bf16.xpose.msra.mxu0 %v683
          %701 = vmatprep.subr.bf16.mxu0 0
          %702 = vmatpush2.bf16.xpose.msra.mxu0 0
          %703 = vmatprep.subr.bf16.mxu0 0
          %704 = vmatpush2.bf16.xpose.msra.mxu0 0
          %705 = vmatprep.subr.bf16.mxu0 0
          %706 = vmatpush2.bf16.xpose.msra.mxu0 0
          %707 = vmatprep.subr.bf16.mxu0 0
          %708 = vmatpush2.bf16.xpose.msra.mxu0 0
          %709 = vmatprep.subr.bf16.mxu0 0
          %710 = vmatpush2.bf16.xpose.msra.mxu0 0
          %711 = vmatprep.subr.bf16.mxu0 0
          %712 = vmatpush2.bf16.xpose.msra.mxu0 0
          %713 = vmatprep.subr.bf16.mxu0 0
          %714 = vmatpush2.bf16.xpose.msra.mxu0 0
          %715 = vmatprep.subr.bf16.mxu0 0
          %716 = vmatpush2.bf16.xpose.msra.mxu0 0
          %717 = vmatprep.mubr.bf16.mxu0 0
          %718 = vmatmul.mubr.bf16.gmra.mxu0 %v680
          %v719 = vpop.f32.mrf.mxu0
          %v720 = vadd.f32 0.0, %v719
          %v721 = vpop.f32.mrf.mxu0
          %v722 = vpop.f32.mrf.mxu0
          %v723 = vpop.f32.mrf.mxu0
          %724 = vdwg.mxu0
          %v725 = vsel %vm587, %v720, -1.7677669e+08
          %s726 = scalar_lea.vmem [#allocation3], 8
          %v727 = vld [vmem:[%s726] sm:$0xff]
          %v728 = vsel %vm590, %v725, -inf
          %729 = vmax.xlane.f32.xlu0 %v728
          %v730 = vpop.xlane.xlu0 %729
          %v731 = vmax.f32 %v727, %v730
          %v732 = vsub.f32 %v727, %v731
          %v733 = vmul.f32 %v732, 1.442695
          %v734 = vpow.pop %v733
          %736 = vset.pattern.permute.xlu0 0
          %737 = vperm.xlu0 %736, %v731
          %v738 = vpop.permute.xlu0 %737
          %v740 = vsub.f32 %v725, %v738
          %v741 = vmul.f32 %v740, 1.442695
          %v742 = vpow.pop %v741
          %s743 = scalar_lea.vmem [#allocation4], 8
          %v744 = vld [vmem:[%s743] sm:$0xff]
          %v745 = vmul.f32 %v734, %v744
          %v746 = vsel %vm590, %v742, 0.0
          %747 = vadd.xlane.f32.xlu0 %v746
          %v748 = vpop.xlane.xlu0 %747
          %v749 = vadd.f32 %v745, %v748
          %750 = vst.msk [vmem:[%s743] sm:$0xff] %vm612, %v749
          %s751 = scalar_lea.vmem [#allocation5], 8
          %v752 = vld [vmem:[%s751] sm:$0xff]
          %754 = vset.pattern.permute.xlu0 0
          %755 = vperm.xlu0 %754, %v734
          %v756 = vpop.permute.xlu0 %755
          %v758 = vmul.f32 %v756, %v752
          %v759 = vpack.c.bf16 %v742, %v742
          %v761 = vunpack.c.l.b16 %v536
          %v762 = vpack.c.b16 %v761, %v761
          %763 = vrot.lane.b32.xlu0 %v762, 96
          %v764 = vpop.permute.xlu0 %763
          %v766 = vsel %vm590, %v759, 0
          %v769 = vsel %vm625, %v764, 0
          %771 = vmatprep.subr.bf16.mxu0 0
          %772 = vmatpush1.bf16.msra.mxu0 0
          %773 = vmatprep.subr.bf16.mxu0 0
          %774 = vmatpush1.bf16.msra.mxu0 0
          %775 = vmatprep.subr.bf16.mxu0 0
          %776 = vmatpush1.bf16.msra.mxu0 0
          %777 = vmatprep.subr.bf16.mxu0 0
          %778 = vmatpush1.bf16.msra.mxu0 0
          %779 = vmatprep.subr.bf16.mxu0 0
          %780 = vmatpush1.bf16.msra.mxu0 0
          %781 = vmatprep.subr.bf16.mxu0 0
          %782 = vmatpush1.bf16.msra.mxu0 0
          %783 = vmatprep.subr.bf16.mxu0 0
          %784 = vmatpush1.bf16.msra.mxu0 0
          %785 = vmatprep.subr.bf16.mxu0 0
          %786 = vmatpush1.bf16.msra.mxu0 %v769
          %787 = vmatprep.subr.bf16.mxu0 0
          %788 = vmatpush2.bf16.msra.mxu0 0
          %789 = vmatprep.subr.bf16.mxu0 0
          %790 = vmatpush2.bf16.msra.mxu0 0
          %791 = vmatprep.subr.bf16.mxu0 0
          %792 = vmatpush2.bf16.msra.mxu0 0
          %793 = vmatprep.subr.bf16.mxu0 0
          %794 = vmatpush2.bf16.msra.mxu0 0
          %795 = vmatprep.subr.bf16.mxu0 0
          %796 = vmatpush2.bf16.msra.mxu0 0
          %797 = vmatprep.subr.bf16.mxu0 0
          %798 = vmatpush2.bf16.msra.mxu0 0
          %799 = vmatprep.subr.bf16.mxu0 0
          %800 = vmatpush2.bf16.msra.mxu0 0
          %801 = vmatprep.subr.bf16.mxu0 0
          %802 = vmatpush2.bf16.msra.mxu0 0
          %803 = vmatprep.mubr.bf16.mxu0 0
          %804 = vmatmul.mubr.bf16.gmra.mxu0 %v766
          %v805 = vpop.f32.mrf.mxu0
          %v806 = vadd.f32 0.0, %v805
          %v807 = vpop.f32.mrf.mxu0
          %v808 = vpop.f32.mrf.mxu0
          %v809 = vpop.f32.mrf.mxu0
          %810 = vdwg.mxu0
          %v811 = vadd.f32 %v758, %v806
          %812 = vst.msk [vmem:[%s751] sm:$0xff] %vm538, %v811
          %813 = vst.msk [vmem:[%s726] sm:$0xff] %vm612, %v731
          %s814 = scalar_lea.vmem [#allocation2], 8
          %v815 = vld [vmem:[%s814] sm:$0xf]
          %816 = vrot.lane.b32.xlu0 %v676, 64
          %v817 = vpop.permute.xlu0 %816
          %v819 = vsel %vm538, %v815, 0
          %v822 = vsel %vm538, %v817, 0
          %824 = vmatprep.subr.bf16.mxu0 0
          %825 = vmatpush1.bf16.xpose.msra.mxu0 0
          %826 = vmatprep.subr.bf16.mxu0 0
          %827 = vmatpush1.bf16.xpose.msra.mxu0 0
          %828 = vmatprep.subr.bf16.mxu0 0
          %829 = vmatpush1.bf16.xpose.msra.mxu0 0
          %830 = vmatprep.subr.bf16.mxu0 0
          %831 = vmatpush1.bf16.xpose.msra.mxu0 0
          %832 = vmatprep.subr.bf16.mxu0 0
          %833 = vmatpush1.bf16.xpose.msra.mxu0 0
          %834 = vmatprep.subr.bf16.mxu0 0
          %835 = vmatpush1.bf16.xpose.msra.mxu0 0
          %836 = vmatprep.subr.bf16.mxu0 0
          %837 = vmatpush1.bf16.xpose.msra.mxu0 0
          %838 = vmatprep.subr.bf16.mxu0 0
          %839 = vmatpush1.bf16.xpose.msra.mxu0 %v822
          %840 = vmatprep.subr.bf16.mxu0 0
          %841 = vmatpush2.bf16.xpose.msra.mxu0 0
          %842 = vmatprep.subr.bf16.mxu0 0
          %843 = vmatpush2.bf16.xpose.msra.mxu0 0
          %844 = vmatprep.subr.bf16.mxu0 0
          %845 = vmatpush2.bf16.xpose.msra.mxu0 0
          %846 = vmatprep.subr.bf16.mxu0 0
          %847 = vmatpush2.bf16.xpose.msra.mxu0 0
          %848 = vmatprep.subr.bf16.mxu0 0
          %849 = vmatpush2.bf16.xpose.msra.mxu0 0
          %850 = vmatprep.subr.bf16.mxu0 0
          %851 = vmatpush2.bf16.xpose.msra.mxu0 0
          %852 = vmatprep.subr.bf16.mxu0 0
          %853 = vmatpush2.bf16.xpose.msra.mxu0 0
          %854 = vmatprep.subr.bf16.mxu0 0
          %855 = vmatpush2.bf16.xpose.msra.mxu0 0
          %856 = vmatprep.mubr.bf16.mxu0 0
          %857 = vmatmul.mubr.bf16.gmra.mxu0 %v819
          %v858 = vpop.f32.mrf.mxu0
          %v859 = vadd.f32 0.0, %v858
          %v860 = vpop.f32.mrf.mxu0
          %v861 = vpop.f32.mrf.mxu0
          %v862 = vpop.f32.mrf.mxu0
          %863 = vdwg.mxu0
          %v864 = vsel %vm587, %v859, -1.7677669e+08
          %s865 = scalar_lea.vmem [#allocation3], 16
          %v866 = vld [vmem:[%s865] sm:$0xff]
          %v867 = vsel %vm590, %v864, -inf
          %868 = vmax.xlane.f32.xlu0 %v867
          %v869 = vpop.xlane.xlu0 %868
          %v870 = vmax.f32 %v866, %v869
          %v871 = vsub.f32 %v866, %v870
          %v872 = vmul.f32 %v871, 1.442695
          %v873 = vpow.pop %v872
          %875 = vset.pattern.permute.xlu0 0
          %876 = vperm.xlu0 %875, %v870
          %v877 = vpop.permute.xlu0 %876
          %v879 = vsub.f32 %v864, %v877
          %v880 = vmul.f32 %v879, 1.442695
          %v881 = vpow.pop %v880
          %s882 = scalar_lea.vmem [#allocation4], 16
          %v883 = vld [vmem:[%s882] sm:$0xff]
          %v884 = vmul.f32 %v873, %v883
          %v885 = vsel %vm590, %v881, 0.0
          %886 = vadd.xlane.f32.xlu0 %v885
          %v887 = vpop.xlane.xlu0 %886
          %v888 = vadd.f32 %v884, %v887
          %889 = vst.msk [vmem:[%s882] sm:$0xff] %vm612, %v888
          %s890 = scalar_lea.vmem [#allocation5], 16
          %v891 = vld [vmem:[%s890] sm:$0xff]
          %893 = vset.pattern.permute.xlu0 0
          %894 = vperm.xlu0 %893, %v873
          %v895 = vpop.permute.xlu0 %894
          %v897 = vmul.f32 %v895, %v891
          %v898 = vpack.c.bf16 %v881, %v881
          %899 = vrot.lane.b32.xlu0 %v762, 64
          %v900 = vpop.permute.xlu0 %899
          %v902 = vsel %vm590, %v898, 0
          %v905 = vsel %vm625, %v900, 0
          %907 = vmatprep.subr.bf16.mxu0 0
          %908 = vmatpush1.bf16.msra.mxu0 0
          %909 = vmatprep.subr.bf16.mxu0 0
          %910 = vmatpush1.bf16.msra.mxu0 0
          %911 = vmatprep.subr.bf16.mxu0 0
          %912 = vmatpush1.bf16.msra.mxu0 0
          %913 = vmatprep.subr.bf16.mxu0 0
          %914 = vmatpush1.bf16.msra.mxu0 0
          %915 = vmatprep.subr.bf16.mxu0 0
          %916 = vmatpush1.bf16.msra.mxu0 0
          %917 = vmatprep.subr.bf16.mxu0 0
          %918 = vmatpush1.bf16.msra.mxu0 0
          %919 = vmatprep.subr.bf16.mxu0 0
          %920 = vmatpush1.bf16.msra.mxu0 0
          %921 = vmatprep.subr.bf16.mxu0 0
          %922 = vmatpush1.bf16.msra.mxu0 %v905
          %923 = vmatprep.subr.bf16.mxu0 0
          %924 = vmatpush2.bf16.msra.mxu0 0
          %925 = vmatprep.subr.bf16.mxu0 0
          %926 = vmatpush2.bf16.msra.mxu0 0
          %927 = vmatprep.subr.bf16.mxu0 0
          %928 = vmatpush2.bf16.msra.mxu0 0
          %929 = vmatprep.subr.bf16.mxu0 0
          %930 = vmatpush2.bf16.msra.mxu0 0
          %931 = vmatprep.subr.bf16.mxu0 0
          %932 = vmatpush2.bf16.msra.mxu0 0
          %933 = vmatprep.subr.bf16.mxu0 0
          %934 = vmatpush2.bf16.msra.mxu0 0
          %935 = vmatprep.subr.bf16.mxu0 0
          %936 = vmatpush2.bf16.msra.mxu0 0
          %937 = vmatprep.subr.bf16.mxu0 0
          %938 = vmatpush2.bf16.msra.mxu0 0
          %939 = vmatprep.mubr.bf16.mxu0 0
          %940 = vmatmul.mubr.bf16.gmra.mxu0 %v902
          %v941 = vpop.f32.mrf.mxu0
          %v942 = vadd.f32 0.0, %v941
          %v943 = vpop.f32.mrf.mxu0
          %v944 = vpop.f32.mrf.mxu0
          %v945 = vpop.f32.mrf.mxu0
          %946 = vdwg.mxu0
          %v947 = vadd.f32 %v897, %v942
          %948 = vst.msk [vmem:[%s890] sm:$0xff] %vm538, %v947
          %949 = vst.msk [vmem:[%s865] sm:$0xff] %vm612, %v870
          %s950 = scalar_lea.vmem [#allocation2], 12
          %v951 = vld [vmem:[%s950] sm:$0xf]
          %952 = vrot.lane.b32.xlu0 %v676, 32
          %v953 = vpop.permute.xlu0 %952
          %v955 = vsel %vm538, %v951, 0
          %v958 = vsel %vm538, %v953, 0
          %960 = vmatprep.subr.bf16.mxu0 0
          %961 = vmatpush1.bf16.xpose.msra.mxu0 0
          %962 = vmatprep.subr.bf16.mxu0 0
          %963 = vmatpush1.bf16.xpose.msra.mxu0 0
          %964 = vmatprep.subr.bf16.mxu0 0
          %965 = vmatpush1.bf16.xpose.msra.mxu0 0
          %966 = vmatprep.subr.bf16.mxu0 0
          %967 = vmatpush1.bf16.xpose.msra.mxu0 0
          %968 = vmatprep.subr.bf16.mxu0 0
          %969 = vmatpush1.bf16.xpose.msra.mxu0 0
          %970 = vmatprep.subr.bf16.mxu0 0
          %971 = vmatpush1.bf16.xpose.msra.mxu0 0
          %972 = vmatprep.subr.bf16.mxu0 0
          %973 = vmatpush1.bf16.xpose.msra.mxu0 0
          %974 = vmatprep.subr.bf16.mxu0 0
          %975 = vmatpush1.bf16.xpose.msra.mxu0 %v958
          %976 = vmatprep.subr.bf16.mxu0 0
          %977 = vmatpush2.bf16.xpose.msra.mxu0 0
          %978 = vmatprep.subr.bf16.mxu0 0
          %979 = vmatpush2.bf16.xpose.msra.mxu0 0
          %980 = vmatprep.subr.bf16.mxu0 0
          %981 = vmatpush2.bf16.xpose.msra.mxu0 0
          %982 = vmatprep.subr.bf16.mxu0 0
          %983 = vmatpush2.bf16.xpose.msra.mxu0 0
          %984 = vmatprep.subr.bf16.mxu0 0
          %985 = vmatpush2.bf16.xpose.msra.mxu0 0
          %986 = vmatprep.subr.bf16.mxu0 0
          %987 = vmatpush2.bf16.xpose.msra.mxu0 0
          %988 = vmatprep.subr.bf16.mxu0 0
          %989 = vmatpush2.bf16.xpose.msra.mxu0 0
          %990 = vmatprep.subr.bf16.mxu0 0
          %991 = vmatpush2.bf16.xpose.msra.mxu0 0
          %992 = vmatprep.mubr.bf16.mxu0 0
          %993 = vmatmul.mubr.bf16.gmra.mxu0 %v955
          %v994 = vpop.f32.mrf.mxu0
          %v995 = vadd.f32 0.0, %v994
          %v996 = vpop.f32.mrf.mxu0
          %v997 = vpop.f32.mrf.mxu0
          %v998 = vpop.f32.mrf.mxu0
          %999 = vdwg.mxu0
          %v1000 = vsel %vm587, %v995, -1.7677669e+08
          %s1001 = scalar_lea.vmem [#allocation3], 24
          %v1002 = vld [vmem:[%s1001] sm:$0xff]
          %v1003 = vsel %vm590, %v1000, -inf
          %1004 = vmax.xlane.f32.xlu0 %v1003
          %v1005 = vpop.xlane.xlu0 %1004
          %v1006 = vmax.f32 %v1002, %v1005
          %v1007 = vsub.f32 %v1002, %v1006
          %v1008 = vmul.f32 %v1007, 1.442695
          %v1009 = vpow.pop %v1008
          %1011 = vset.pattern.permute.xlu0 0
          %1012 = vperm.xlu0 %1011, %v1006
          %v1013 = vpop.permute.xlu0 %1012
          %v1015 = vsub.f32 %v1000, %v1013
          %v1016 = vmul.f32 %v1015, 1.442695
          %v1017 = vpow.pop %v1016
          %s1018 = scalar_lea.vmem [#allocation4], 24
          %v1019 = vld [vmem:[%s1018] sm:$0xff]
          %v1020 = vmul.f32 %v1009, %v1019
          %v1021 = vsel %vm590, %v1017, 0.0
          %1022 = vadd.xlane.f32.xlu0 %v1021
          %v1023 = vpop.xlane.xlu0 %1022
          %v1024 = vadd.f32 %v1020, %v1023
          %1025 = vst.msk [vmem:[%s1018] sm:$0xff] %vm612, %v1024
          %s1026 = scalar_lea.vmem [#allocation5], 24
          %v1027 = vld [vmem:[%s1026] sm:$0xff]
          %1029 = vset.pattern.permute.xlu0 0
          %1030 = vperm.xlu0 %1029, %v1009
          %v1031 = vpop.permute.xlu0 %1030
          %v1033 = vmul.f32 %v1031, %v1027
          %v1034 = vpack.c.bf16 %v1017, %v1017
          %1035 = vrot.lane.b32.xlu0 %v762, 32
          %v1036 = vpop.permute.xlu0 %1035
          %v1038 = vsel %vm590, %v1034, 0
          %v1041 = vsel %vm625, %v1036, 0
          %1043 = vmatprep.subr.bf16.mxu0 0
          %1044 = vmatpush1.bf16.msra.mxu0 0
          %1045 = vmatprep.subr.bf16.mxu0 0
          %1046 = vmatpush1.bf16.msra.mxu0 0
          %1047 = vmatprep.subr.bf16.mxu0 0
          %1048 = vmatpush1.bf16.msra.mxu0 0
          %1049 = vmatprep.subr.bf16.mxu0 0
          %1050 = vmatpush1.bf16.msra.mxu0 0
          %1051 = vmatprep.subr.bf16.mxu0 0
          %1052 = vmatpush1.bf16.msra.mxu0 0
          %1053 = vmatprep.subr.bf16.mxu0 0
          %1054 = vmatpush1.bf16.msra.mxu0 0
          %1055 = vmatprep.subr.bf16.mxu0 0
          %1056 = vmatpush1.bf16.msra.mxu0 0
          %1057 = vmatprep.subr.bf16.mxu0 0
          %1058 = vmatpush1.bf16.msra.mxu0 %v1041
          %1059 = vmatprep.subr.bf16.mxu0 0
          %1060 = vmatpush2.bf16.msra.mxu0 0
          %1061 = vmatprep.subr.bf16.mxu0 0
          %1062 = vmatpush2.bf16.msra.mxu0 0
          %1063 = vmatprep.subr.bf16.mxu0 0
          %1064 = vmatpush2.bf16.msra.mxu0 0
          %1065 = vmatprep.subr.bf16.mxu0 0
          %1066 = vmatpush2.bf16.msra.mxu0 0
          %1067 = vmatprep.subr.bf16.mxu0 0
          %1068 = vmatpush2.bf16.msra.mxu0 0
          %1069 = vmatprep.subr.bf16.mxu0 0
          %1070 = vmatpush2.bf16.msra.mxu0 0
          %1071 = vmatprep.subr.bf16.mxu0 0
          %1072 = vmatpush2.bf16.msra.mxu0 0
          %1073 = vmatprep.subr.bf16.mxu0 0
          %1074 = vmatpush2.bf16.msra.mxu0 0
          %1075 = vmatprep.mubr.bf16.mxu0 0
          %1076 = vmatmul.mubr.bf16.gmra.mxu0 %v1038
          %v1077 = vpop.f32.mrf.mxu0
          %v1078 = vadd.f32 0.0, %v1077
          %v1079 = vpop.f32.mrf.mxu0
          %v1080 = vpop.f32.mrf.mxu0
          %v1081 = vpop.f32.mrf.mxu0
          %1082 = vdwg.mxu0
          %v1083 = vadd.f32 %v1033, %v1078
          %1084 = vst.msk [vmem:[%s1026] sm:$0xff] %vm538, %v1083
          %1085 = vst.msk [vmem:[%s1001] sm:$0xff] %vm612, %v1006
        $region56: #{tpu_custom_call.1} parent=35 // pred_fallthru
          _
        // Predicated region
        $region57: #{tpu_custom_call.1} parent=35 // pred_check
          %p1086 = pneg %p487
        $region58: #{tpu_custom_call.1} parent=35 // pred_check_branch
          %1088 = sbr.rel (%p1086) target = $region60
        $region59: #{tpu_custom_call.1} parent=35 // pred_region
          %v1089 = vld [vmem:[#allocation4] sm:$0xff]
          %v1090 = vrcp.pop %v1089
          %v1091 = vld [vmem:[#allocation5] sm:$0xff]
          %1093 = vset.pattern.permute.xlu0 0
          %1094 = vperm.xlu0 %1093, %v1090
          %v1095 = vpop.permute.xlu0 %1094
          %v1097 = vmul.f32 %v1091, %v1095
          %s1098 = scalar_lea.vmem [#allocation4], 8
          %v1099 = vld [vmem:[%s1098] sm:$0xff]
          %v1100 = vrcp.pop %v1099
          %s1101 = scalar_lea.vmem [#allocation5], 8
          %v1102 = vld [vmem:[%s1101] sm:$0xff]
          %1104 = vset.pattern.permute.xlu0 0
          %1105 = vperm.xlu0 %1104, %v1100
          %v1106 = vpop.permute.xlu0 %1105
          %v1108 = vmul.f32 %v1102, %v1106
          %s1109 = scalar_lea.vmem [#allocation4], 16
          %v1110 = vld [vmem:[%s1109] sm:$0xff]
          %v1111 = vrcp.pop %v1110
          %s1112 = scalar_lea.vmem [#allocation5], 16
          %v1113 = vld [vmem:[%s1112] sm:$0xff]
          %1115 = vset.pattern.permute.xlu0 0
          %1116 = vperm.xlu0 %1115, %v1111
          %v1117 = vpop.permute.xlu0 %1116
          %v1119 = vmul.f32 %v1113, %v1117
          %s1120 = scalar_lea.vmem [#allocation4], 24
          %v1121 = vld [vmem:[%s1120] sm:$0xff]
          %v1122 = vrcp.pop %v1121
          %s1123 = scalar_lea.vmem [#allocation5], 24
          %v1124 = vld [vmem:[%s1123] sm:$0xff]
          %1126 = vset.pattern.permute.xlu0 0
          %1127 = vperm.xlu0 %1126, %v1122
          %v1128 = vpop.permute.xlu0 %1127
          %v1130 = vmul.f32 %v1124, %v1128
          %1132 = vrot.lane.b32.xlu0 %v1108, 32
          %v1133 = vpop.permute.xlu0 %1132
          %1136 = vrot.lane.b32.xlu0 %v1119, 64
          %v1137 = vpop.permute.xlu0 %1136
          %1140 = vrot.lane.b32.xlu0 %v1130, 96
          %v1141 = vpop.permute.xlu0 %1140
          %vm1143 = vcmask 261120
          %v1144 = vsel %vm1143, %v1097, %v1133
          %vm1145 = vcmask 523264
          %v1146 = vsel %vm1145, %v1144, %v1137
          %vm1147 = vcmask 785408
          %v1148 = vsel %vm1147, %v1146, %v1141
          %1149 = vst [vmem:[%s444] sm:$0xff] %v1148
        $region60: #{tpu_custom_call.1} parent=35 // pred_fallthru
          _
        %s1150 = sand.u32 %s232, 1
        %s1151 = scalar_lea.sflag [#allocation11], %s1150
        %s1152 = sand.u32 %s232, 1
        %s1153 = smul.addr %s1152, 8
        %s1154 = scalar_lea.vmem [#allocation15], %s1153
        // Predicated region
        $region61: #{tpu_custom_call.1} parent=35 // pred_check
          %p1155 = pneg %p242
        $region62: #{tpu_custom_call.1} parent=35 // pred_check_branch
          %1157 = sbr.rel (%p1155) target = $region64
        $region63: #{tpu_custom_call.1} parent=35 // pred_region
          %s1159 = ssub.s32 128, 128
          %1160 = vsyncadd %s1151, %s1159
          %s1161 = sadd.s32 %s36, %s34
          %s1162 = sadd.s32 %s1161, %s35
          %s1163 = smul.addr %s1162, 128
          %s1164 = scalar_lea.hbm %s6, %s1163
          %s1166 = sshll.u32 %s1154, 4
          %s1167 = int_to_ptr.vmem [resolvable:$true] %s1166
          %1169 = dma.vmem_to_hbm [thread:$0]  %s1167, 128, %s1164, %s1151
        $region64: #{tpu_custom_call.1} parent=35 // pred_fallthru
          _
      $region36: #{tpu_custom_call.1} parent=5 // pred_fallthru
        _
      %p1170 = scmp.le.s32.totalorder 2, %s23
      // Predicated region
      $region65: #{tpu_custom_call.1} parent=5 // pred_check
        %p1171 = pneg %p1170
      $region66: #{tpu_custom_call.1} parent=5 // pred_check_branch
        %1173 = sbr.rel (%p1171) target = $region68
      $region67: #{tpu_custom_call.1} parent=5 // pred_region
        %s1174 = ssub.s32 %s23, 2
        // Predicated region
        $region69: #{tpu_custom_call.1} parent=67 // pred_check
          %p1175 = pneg %p248
        $region70: #{tpu_custom_call.1} parent=67 // pred_check_branch
          %1177 = sbr.rel (%p1175) target = $region72
        $region71: #{tpu_custom_call.1} parent=67 // pred_region
          %s1178 = sand.u32 %s233, 1
          %s1179 = scalar_lea.sflag [#allocation11], %s1178
          %s1180 = sand.u32 %s233, 1
          %s1181 = smul.addr %s1180, 8
          %s1182 = scalar_lea.vmem [#allocation15], %s1181
          %1183 = dma.done %s1179, 128
        $region72: #{tpu_custom_call.1} parent=67 // pred_fallthru
          _
      $region68: #{tpu_custom_call.1} parent=5 // pred_fallthru
        _
    $region6: #{tpu_custom_call.1} parent=1 // loop_footer
      %s27 = sadd.s32 1, %s23
    $region7: #{tpu_custom_call.1} parent=1 // loop_footer_branch
      %22 = sbr.rel target = $region3
    $region8: #{tpu_custom_call.1} parent=1 // loop_exit
      _
    %1184 = vsyncpa [#allocation10], 1
    %s1185 = scalar_lea.sflag [#allocation10], 1
    %1186 = vsyncpa %s1185, 1
    %1187 = vsyncpa [#allocation13], 1
    %s1188 = scalar_lea.sflag [#allocation13], 1
    %1189 = vsyncpa %s1188, 1
    %1190 = vsyncpa [#allocation11], 1
    %s1191 = scalar_lea.sflag [#allocation11], 1
    %1192 = vsyncpa %s1191, 1

</llo_original>
